<compile_context>
chip_gen: v6e
topology: v6e:2x2x1
jax: 0.10.0
libtpu: 0.0.40
codegen_flags: <defaults>
</compile_context>

<pallas_src>
import jax
import jax.numpy as jnp
import numpy as np
from jax.experimental import pallas as pl
from jax.experimental.pallas import tpu as pltpu


# ---------------------- Fused LSTM + attention kernel ------------------------
def lstm_attn_kernel(xp_ref, whh_ref, watt_ref, batt_ref, out_ref,
                     h_scr, c_scr, m_scr, l_scr, acc_scr):
    t_idx = pl.program_id(1)

    @pl.when(t_idx == 0)
    def _init():
        h_scr[...] = jnp.zeros_like(h_scr)
        c_scr[...] = jnp.zeros_like(c_scr)
        m_scr[...] = jnp.full(m_scr.shape, -jnp.inf, dtype=m_scr.dtype)
        l_scr[...] = jnp.zeros_like(l_scr)
        acc_scr[...] = jnp.zeros_like(acc_scr)

    H = h_scr.shape[-1]
    Tc = xp_ref.shape[0]
    whh = whh_ref[...]          # (H, 4H), constant across the time loop
    watt = watt_ref[...]        # (1, H)
    batt = batt_ref[...]        # (1, 1)

    def step(t, carry):
        h, c, m, l, acc = carry
        # Only the hidden->hidden matmul remains on the serial chain (Xp precomputed).
        gates = xp_ref[t] + jnp.dot(h, whh, preferred_element_type=jnp.float32)  # (Bc, 4H)
        i_g = jax.nn.sigmoid(gates[:, 0:H])
        f_g = jax.nn.sigmoid(gates[:, H:2 * H])
        g_g = jnp.tanh(gates[:, 2 * H:3 * H])
        o_g = jax.nn.sigmoid(gates[:, 3 * H:4 * H])
        c = f_g * c + i_g * g_g
        h = o_g * jnp.tanh(c)
        # Fused attention pooling via online softmax over the time axis.
        s = jnp.sum(h * watt, axis=-1, keepdims=True) + batt        # (Bc, 1)
        m_new = jnp.maximum(m, s)
        alpha = jnp.exp(m - m_new)
        p = jnp.exp(s - m_new)
        l = alpha * l + p
        acc = alpha * acc + p * h
        return h, c, m_new, l, acc

    carry0 = (h_scr[...], c_scr[...], m_scr[...], l_scr[...], acc_scr[...])
    h, c, m, l, acc = jax.lax.fori_loop(0, Tc, step, carry0, unroll=True)
    h_scr[...] = h
    c_scr[...] = c
    m_scr[...] = m
    l_scr[...] = l
    acc_scr[...] = acc

    @pl.when(t_idx == pl.num_programs(1) - 1)
    def _finalize():
        # Runs once per batch chunk (off the critical path); exact reciprocal keeps the
        # tight numerical check.  Flip to approx=True for the EUP fast path if desired.
        out_ref[...] = acc * pl.reciprocal(l, approx=False)


# ------------------------------- Wrapper --------------------------------------
def _largest_divisor_at_most(n, cap):
    for c in range(min(n, cap), 0, -1):
        if n % c == 0:
            return c
    return 1


@jax.jit
def lstm_with_attention(x, wih, whh, b_lstm, w_att, b_att):
    """x: (B, T, D) batch-first float32. b_lstm = b_ih + b_hh, shape (1, 4H). Returns (B, H)."""
    B, T, D = x.shape
    H = whh.shape[0]
    G = 4 * H

    # Pad batch to a sublane multiple (8); padded rows evolve independently and are sliced off.
    Bp = ((B + 7) // 8) * 8
    if Bp != B:
        x = jnp.pad(x, ((0, Bp - B), (0, 0), (0, 0)))

    # Hoisted input projection: one large MXU-shaped matmul with bias folded in, produced
    # directly in time-major layout (no explicit transpose pass over x).
    xp = jnp.einsum("btd,dg->tbg", x, wih) + b_lstm            # (T, Bp, 4H) float32

    # Time chunking: amortize per-grid-step pipeline overhead over Tc steps per grid step.
    Tc = _largest_divisor_at_most(T, 16)
    NT = T // Tc
    # Batch chunking: two chunks when possible so the 'parallel' axis can shard the
    # independent per-batch recurrences across v7x's 2 TensorCores.
    if Bp >= 16 and Bp % 16 == 0:
        Bc = Bp // 2
    else:
        Bc = Bp
    NB = Bp // Bc

    out = pl.pallas_call(
        lstm_attn_kernel,
        out_shape=jax.ShapeDtypeStruct((Bp, H), jnp.float32),
        grid_spec=pltpu.PrefetchScalarGridSpec(
            num_scalar_prefetch=0,
            grid=(NB, NT),
            in_specs=[
                pl.BlockSpec((Tc, Bc, G), lambda b, t: (t, b, 0)),   # Xp time/batch chunk
                pl.BlockSpec((H, G), lambda b, t: (0, 0)),           # W_hh (constant)
                pl.BlockSpec((1, H), lambda b, t: (0, 0)),           # attention weight
                pl.BlockSpec((1, 1), lambda b, t: (0, 0)),           # attention bias
            ],
            out_specs=pl.BlockSpec((Bc, H), lambda b, t: (b, 0)),
            scratch_shapes=[
                pltpu.VMEM((Bc, H), jnp.float32),   # h state
                pltpu.VMEM((Bc, H), jnp.float32),   # c state
                pltpu.VMEM((Bc, 1), jnp.float32),   # online-softmax running max
                pltpu.VMEM((Bc, 1), jnp.float32),   # online-softmax running denom
                pltpu.VMEM((Bc, H), jnp.float32),   # attention-weighted accumulator
            ],
        ),
        compiler_params=pltpu.CompilerParams(
            dimension_semantics=("parallel", "arbitrary"),
            vmem_limit_bytes=48 * 1024 * 1024,
        ),
    )(xp, whh, w_att, b_att)

    return out[:B]


# --------------------------- Pure-JAX reference ------------------------------
def reference(x, wih, whh, b_lstm, w_att, b_att):
    B, T, D = x.shape
    H = whh.shape[0]

    def step(carry, x_t):
        h, c = carry
        gates = x_t @ wih + h @ whh + b_lstm[0]
        i = jax.nn.sigmoid(gates[:, 0:H])
        f = jax.nn.sigmoid(gates[:, H:2 * H])
        g = jnp.tanh(gates[:, 2 * H:3 * H])
        o = jax.nn.sigmoid(gates[:, 3 * H:4 * H])
        c = f * c + i * g
        h = o * jnp.tanh(c)
        return (h, c), h

    h0 = jnp.zeros((B, H), jnp.float32)
    c0 = jnp.zeros((B, H), jnp.float32)
    _, hs = jax.lax.scan(step, (h0, c0), jnp.transpose(x, (1, 0, 2)))   # (T, B, H)
    lstm_out = jnp.transpose(hs, (1, 0, 2))                             # (B, T, H)

    scores = lstm_out @ w_att[0][:, None] + b_att[0, 0]                 # (B, T, 1)
    attn = jax.nn.softmax(scores, axis=1)
    return jnp.sum(lstm_out * attn, axis=1)                             # (B, H)


# --------------------------------- Main ---------------------------------------
if __name__ == "__main__":
    B, T, D, H = 2, 8, 16, 32

    key = jax.random.PRNGKey(0)
    k_x, k_wih, k_whh, k_b, k_wa, k_ba = jax.random.split(key, 6)

    x = jax.random.normal(k_x, (B, T, D), dtype=jnp.float32)

    scale = 1.0 / np.sqrt(H)
    wih = jax.random.uniform(k_wih, (D, 4 * H), jnp.float32, -scale, scale)
    whh = jax.random.uniform(k_whh, (H, 4 * H), jnp.float32, -scale, scale)
    b_lstm = jax.random.uniform(k_b, (1, 4 * H), jnp.float32, -scale, scale)   # b_ih + b_hh
    w_att = jax.random.uniform(k_wa, (1, H), jnp.float32, -scale, scale)
    b_att = jax.random.uniform(k_ba, (1, 1), jnp.float32, -scale, scale)

    out = lstm_with_attention(x, wih, whh, b_lstm, w_att, b_att)
    out = jax.block_until_ready(out)

    ref = jax.block_until_ready(reference(x, wih, whh, b_lstm, w_att, b_att))
    assert out.shape == (B, H)
    np.testing.assert_allclose(np.asarray(out), np.asarray(ref), rtol=2e-5, atol=2e-5)

    print("KERNEL_OK")
</pallas_src>

<mosaic_0001>
module attributes {stable_mosaic.version = 11 : i64} {
  func.func @lstm_attn_kernel(%arg0: i32, %arg1: i32, %arg2: memref<8x8x128xf32, #tpu.memory_space<vmem>>, %arg3: memref<32x128xf32, #tpu.memory_space<vmem>>, %arg4: memref<1x32xf32, #tpu.memory_space<vmem>>, %arg5: memref<1x1xf32, #tpu.memory_space<vmem>>, %arg6: memref<8x32xf32, #tpu.memory_space<vmem>>, %arg7: memref<8x32xf32, #tpu.memory_space<vmem>>, %arg8: memref<8x32xf32, #tpu.memory_space<vmem>>, %arg9: memref<8x1xf32, #tpu.memory_space<vmem>>, %arg10: memref<8x1xf32, #tpu.memory_space<vmem>>, %arg11: memref<8x32xf32, #tpu.memory_space<vmem>>) attributes {dimension_semantics = [#tpu.dimension_semantics<parallel>, #tpu.dimension_semantics<arbitrary>], iteration_bounds = array<i64: 1, 1>, scalar_prefetch = 0 : i64, scratch_operands = 5 : i64, tpu.core_type = #tpu.core_type<tc>, window_params = [{transform_indices = @transform_0, window_bounds = array<i64: 8, 8, 128>}, {pipeline_mode = #tpu.pipeline_mode<synchronous>, transform_indices = @transform_1, window_bounds = array<i64: 32, 128>}, {pipeline_mode = #tpu.pipeline_mode<synchronous>, transform_indices = @transform_2, window_bounds = array<i64: 1, 32>}, {pipeline_mode = #tpu.pipeline_mode<synchronous>, transform_indices = @transform_3, window_bounds = array<i64: 1, 1>}, {transform_indices = @transform_4, window_bounds = array<i64: 8, 32>}]} {
    %c0_i32 = arith.constant 0 : i32
    %0 = arith.cmpi eq, %arg1, %c0_i32 : i32
    %1 = arith.extui %0 : i1 to i32
    %c0_i32_0 = arith.constant 0 : i32
    %2 = arith.cmpi ne, %1, %c0_i32_0 : i32
    scf.if %2 {
      %cst_84 = arith.constant 0.000000e+00 : f32
      %403 = vector.broadcast %cst_84 : f32 to vector<8x32xf32>
      %c0_85 = arith.constant 0 : index
      %c0_86 = arith.constant 0 : index
      %404 = vector.load %arg7[%c0_85, %c0_86] : memref<8x32xf32, #tpu.memory_space<vmem>>, vector<8x32xf32>
      tpu.vector_store %arg7[%c0_85, %c0_86], %403 {strides = array<i32>} : memref<8x32xf32, #tpu.memory_space<vmem>>, vector<8x32xf32>,
      %cst_87 = arith.constant 0.000000e+00 : f32
      %405 = vector.broadcast %cst_87 : f32 to vector<8x32xf32>
      %c0_88 = arith.constant 0 : index
      %c0_89 = arith.constant 0 : index
      %406 = vector.load %arg8[%c0_88, %c0_89] : memref<8x32xf32, #tpu.memory_space<vmem>>, vector<8x32xf32>
      tpu.vector_store %arg8[%c0_88, %c0_89], %405 {strides = array<i32>} : memref<8x32xf32, #tpu.memory_space<vmem>>, vector<8x32xf32>,
      %cst_90 = arith.constant 0xFF800000 : f32
      %407 = vector.broadcast %cst_90 : f32 to vector<8x1xf32>
      %c0_91 = arith.constant 0 : index
      %c0_92 = arith.constant 0 : index
      %408 = vector.load %arg9[%c0_91, %c0_92] : memref<8x1xf32, #tpu.memory_space<vmem>>, vector<8x1xf32>
      tpu.vector_store %arg9[%c0_91, %c0_92], %407 {strides = array<i32>} : memref<8x1xf32, #tpu.memory_space<vmem>>, vector<8x1xf32>,
      %cst_93 = arith.constant 0.000000e+00 : f32
      %409 = vector.broadcast %cst_93 : f32 to vector<8x1xf32>
      %c0_94 = arith.constant 0 : index
      %c0_95 = arith.constant 0 : index
      %410 = vector.load %arg10[%c0_94, %c0_95] : memref<8x1xf32, #tpu.memory_space<vmem>>, vector<8x1xf32>
      tpu.vector_store %arg10[%c0_94, %c0_95], %409 {strides = array<i32>} : memref<8x1xf32, #tpu.memory_space<vmem>>, vector<8x1xf32>,
      %cst_96 = arith.constant 0.000000e+00 : f32
      %411 = vector.broadcast %cst_96 : f32 to vector<8x32xf32>
      %c0_97 = arith.constant 0 : index
      %c0_98 = arith.constant 0 : index
      %412 = vector.load %arg11[%c0_97, %c0_98] : memref<8x32xf32, #tpu.memory_space<vmem>>, vector<8x32xf32>
      tpu.vector_store %arg11[%c0_97, %c0_98], %411 {strides = array<i32>} : memref<8x32xf32, #tpu.memory_space<vmem>>, vector<8x32xf32>,
    } else {
    }
    %c0 = arith.constant 0 : index
    %c0_1 = arith.constant 0 : index
    %3 = vector.load %arg3[%c0, %c0_1] : memref<32x128xf32, #tpu.memory_space<vmem>>, vector<32x128xf32>
    %c0_2 = arith.constant 0 : index
    %c0_3 = arith.constant 0 : index
    %4 = vector.load %arg4[%c0_2, %c0_3] : memref<1x32xf32, #tpu.memory_space<vmem>>, vector<1x32xf32>
    %c0_4 = arith.constant 0 : index
    %c0_5 = arith.constant 0 : index
    %5 = vector.load %arg5[%c0_4, %c0_5] : memref<1x1xf32, #tpu.memory_space<vmem>>, vector<1x1xf32>
    %c0_6 = arith.constant 0 : index
    %c0_7 = arith.constant 0 : index
    %6 = vector.load %arg7[%c0_6, %c0_7] : memref<8x32xf32, #tpu.memory_space<vmem>>, vector<8x32xf32>
    %c0_8 = arith.constant 0 : index
    %c0_9 = arith.constant 0 : index
    %7 = vector.load %arg8[%c0_8, %c0_9] : memref<8x32xf32, #tpu.memory_space<vmem>>, vector<8x32xf32>
    %c0_10 = arith.constant 0 : index
    %c0_11 = arith.constant 0 : index
    %8 = vector.load %arg9[%c0_10, %c0_11] : memref<8x1xf32, #tpu.memory_space<vmem>>, vector<8x1xf32>
    %c0_12 = arith.constant 0 : index
    %c0_13 = arith.constant 0 : index
    %9 = vector.load %arg10[%c0_12, %c0_13] : memref<8x1xf32, #tpu.memory_space<vmem>>, vector<8x1xf32>
    %c0_14 = arith.constant 0 : index
    %c0_15 = arith.constant 0 : index
    %10 = vector.load %arg11[%c0_14, %c0_15] : memref<8x32xf32, #tpu.memory_space<vmem>>, vector<8x32xf32>
    %c0_i32_16 = arith.constant 0 : i32
    %11 = arith.index_cast %c0_i32_16 : i32 to index
    %c0_17 = arith.constant 0 : index
    %c0_18 = arith.constant 0 : index
    %12 = vector.load %arg2[%11, %c0_17, %c0_18] : memref<8x8x128xf32, #tpu.memory_space<vmem>>, vector<1x8x128xf32>
    %13 = vector.shape_cast %12 : vector<1x8x128xf32> to vector<8x128xf32>
    %cst = arith.constant dense<0.000000e+00> : vector<8x128xf32>
    %14 = tpu.matmul %6, %3, %cst {dimension_numbers = #tpu.dot_dimension_numbers<[1], [0], [0], [1], [0, 0, 1, 1], [], []>} : vector<8x32xf32>, vector<32x128xf32>, vector<8x128xf32> -> vector<8x128xf32>
    %15 = arith.addf %13, %14 : vector<8x128xf32>
    %16 = vector.extract_strided_slice %15 {offsets = [0, 0], sizes = [8, 32], strides = [1, 1]} : vector<8x128xf32> to vector<8x32xf32>
    %17 = arith.negf %16 : vector<8x32xf32>
    %18 = math.exp %17 : vector<8x32xf32>
    %cst_19 = arith.constant 1.000000e+00 : f32
    %19 = vector.broadcast %cst_19 : f32 to vector<8x32xf32>
    %20 = arith.addf %19, %18 : vector<8x32xf32>
    %21 = arith.divf %19, %20 : vector<8x32xf32>
    %22 = vector.extract_strided_slice %15 {offsets = [0, 32], sizes = [8, 32], strides = [1, 1]} : vector<8x128xf32> to vector<8x32xf32>
    %23 = arith.negf %22 : vector<8x32xf32>
    %24 = math.exp %23 : vector<8x32xf32>
    %cst_20 = arith.constant 1.000000e+00 : f32
    %25 = vector.broadcast %cst_20 : f32 to vector<8x32xf32>
    %26 = arith.addf %25, %24 : vector<8x32xf32>
    %27 = arith.divf %25, %26 : vector<8x32xf32>
    %28 = vector.extract_strided_slice %15 {offsets = [0, 64], sizes = [8, 32], strides = [1, 1]} : vector<8x128xf32> to vector<8x32xf32>
    %29 = math.tanh %28 : vector<8x32xf32>
    %30 = vector.extract_strided_slice %15 {offsets = [0, 96], sizes = [8, 32], strides = [1, 1]} : vector<8x128xf32> to vector<8x32xf32>
    %31 = arith.negf %30 : vector<8x32xf32>
    %32 = math.exp %31 : vector<8x32xf32>
    %cst_21 = arith.constant 1.000000e+00 : f32
    %33 = vector.broadcast %cst_21 : f32 to vector<8x32xf32>
    %34 = arith.addf %33, %32 : vector<8x32xf32>
    %35 = arith.divf %33, %34 : vector<8x32xf32>
    %36 = arith.mulf %27, %7 : vector<8x32xf32>
    %37 = arith.mulf %21, %29 : vector<8x32xf32>
    %38 = arith.addf %36, %37 : vector<8x32xf32>
    %39 = math.tanh %38 : vector<8x32xf32>
    %40 = arith.mulf %35, %39 : vector<8x32xf32>
    %41 = vector.broadcast %4 : vector<1x32xf32> to vector<8x32xf32>
    %42 = arith.mulf %40, %41 : vector<8x32xf32>
    %cst_22 = arith.constant dense<0.000000e+00> : vector<8xf32>
    %43 = vector.multi_reduction <add>, %42, %cst_22 [1] : vector<8x32xf32> to vector<8xf32>
    %44 = vector.shape_cast %43 : vector<8xf32> to vector<8x1xf32>
    %45 = vector.broadcast %5 : vector<1x1xf32> to vector<8x1xf32>
    %46 = arith.addf %44, %45 : vector<8x1xf32>
    %47 = arith.maximumf %8, %46 : vector<8x1xf32>
    %48 = arith.subf %8, %47 : vector<8x1xf32>
    %49 = math.exp %48 : vector<8x1xf32>
    %50 = arith.subf %46, %47 : vector<8x1xf32>
    %51 = math.exp %50 : vector<8x1xf32>
    %52 = arith.mulf %49, %9 : vector<8x1xf32>
    %53 = arith.addf %52, %51 : vector<8x1xf32>
    %54 = vector.broadcast %49 : vector<8x1xf32> to vector<8x32xf32>
    %55 = arith.mulf %54, %10 : vector<8x32xf32>
    %56 = vector.broadcast %51 : vector<8x1xf32> to vector<8x32xf32>
    %57 = arith.mulf %56, %40 : vector<8x32xf32>
    %58 = arith.addf %55, %57 : vector<8x32xf32>
    %c1_i32 = arith.constant 1 : i32
    %59 = arith.index_cast %c1_i32 : i32 to index
    %c0_23 = arith.constant 0 : index
    %c0_24 = arith.constant 0 : index
    %60 = vector.load %arg2[%59, %c0_23, %c0_24] : memref<8x8x128xf32, #tpu.memory_space<vmem>>, vector<1x8x128xf32>
    %61 = vector.shape_cast %60 : vector<1x8x128xf32> to vector<8x128xf32>
    %cst_25 = arith.constant dense<0.000000e+00> : vector<8x128xf32>
    %62 = tpu.matmul %40, %3, %cst_25 {dimension_numbers = #tpu.dot_dimension_numbers<[1], [0], [0], [1], [0, 0, 1, 1], [], []>} : vector<8x32xf32>, vector<32x128xf32>, vector<8x128xf32> -> vector<8x128xf32>
    %63 = arith.addf %61, %62 : vector<8x128xf32>
    %64 = vector.extract_strided_slice %63 {offsets = [0, 0], sizes = [8, 32], strides = [1, 1]} : vector<8x128xf32> to vector<8x32xf32>
    %65 = arith.negf %64 : vector<8x32xf32>
    %66 = math.exp %65 : vector<8x32xf32>
    %cst_26 = arith.constant 1.000000e+00 : f32
    %67 = vector.broadcast %cst_26 : f32 to vector<8x32xf32>
    %68 = arith.addf %67, %66 : vector<8x32xf32>
    %69 = arith.divf %67, %68 : vector<8x32xf32>
    %70 = vector.extract_strided_slice %63 {offsets = [0, 32], sizes = [8, 32], strides = [1, 1]} : vector<8x128xf32> to vector<8x32xf32>
    %71 = arith.negf %70 : vector<8x32xf32>
    %72 = math.exp %71 : vector<8x32xf32>
    %cst_27 = arith.constant 1.000000e+00 : f32
    %73 = vector.broadcast %cst_27 : f32 to vector<8x32xf32>
    %74 = arith.addf %73, %72 : vector<8x32xf32>
    %75 = arith.divf %73, %74 : vector<8x32xf32>
    %76 = vector.extract_strided_slice %63 {offsets = [0, 64], sizes = [8, 32], strides = [1, 1]} : vector<8x128xf32> to vector<8x32xf32>
    %77 = math.tanh %76 : vector<8x32xf32>
    %78 = vector.extract_strided_slice %63 {offsets = [0, 96], sizes = [8, 32], strides = [1, 1]} : vector<8x128xf32> to vector<8x32xf32>
    %79 = arith.negf %78 : vector<8x32xf32>
    %80 = math.exp %79 : vector<8x32xf32>
    %cst_28 = arith.constant 1.000000e+00 : f32
    %81 = vector.broadcast %cst_28 : f32 to vector<8x32xf32>
    %82 = arith.addf %81, %80 : vector<8x32xf32>
    %83 = arith.divf %81, %82 : vector<8x32xf32>
    %84 = arith.mulf %75, %38 : vector<8x32xf32>
    %85 = arith.mulf %69, %77 : vector<8x32xf32>
    %86 = arith.addf %84, %85 : vector<8x32xf32>
    %87 = math.tanh %86 : vector<8x32xf32>
    %88 = arith.mulf %83, %87 : vector<8x32xf32>
    %89 = vector.broadcast %4 : vector<1x32xf32> to vector<8x32xf32>
    %90 = arith.mulf %88, %89 : vector<8x32xf32>
    %cst_29 = arith.constant dense<0.000000e+00> : vector<8xf32>
    %91 = vector.multi_reduction <add>, %90, %cst_29 [1] : vector<8x32xf32> to vector<8xf32>
    %92 = vector.shape_cast %91 : vector<8xf32> to vector<8x1xf32>
    %93 = vector.broadcast %5 : vector<1x1xf32> to vector<8x1xf32>
    %94 = arith.addf %92, %93 : vector<8x1xf32>
    %95 = arith.maximumf %47, %94 : vector<8x1xf32>
    %96 = arith.subf %47, %95 : vector<8x1xf32>
    %97 = math.exp %96 : vector<8x1xf32>
    %98 = arith.subf %94, %95 : vector<8x1xf32>
    %99 = math.exp %98 : vector<8x1xf32>
    %100 = arith.mulf %97, %53 : vector<8x1xf32>
    %101 = arith.addf %100, %99 : vector<8x1xf32>
    %102 = vector.broadcast %97 : vector<8x1xf32> to vector<8x32xf32>
    %103 = arith.mulf %102, %58 : vector<8x32xf32>
    %104 = vector.broadcast %99 : vector<8x1xf32> to vector<8x32xf32>
    %105 = arith.mulf %104, %88 : vector<8x32xf32>
    %106 = arith.addf %103, %105 : vector<8x32xf32>
    %c2_i32 = arith.constant 2 : i32
    %107 = arith.index_cast %c2_i32 : i32 to index
    %c0_30 = arith.constant 0 : index
    %c0_31 = arith.constant 0 : index
    %108 = vector.load %arg2[%107, %c0_30, %c0_31] : memref<8x8x128xf32, #tpu.memory_space<vmem>>, vector<1x8x128xf32>
    %109 = vector.shape_cast %108 : vector<1x8x128xf32> to vector<8x128xf32>
    %cst_32 = arith.constant dense<0.000000e+00> : vector<8x128xf32>
    %110 = tpu.matmul %88, %3, %cst_32 {dimension_numbers = #tpu.dot_dimension_numbers<[1], [0], [0], [1], [0, 0, 1, 1], [], []>} : vector<8x32xf32>, vector<32x128xf32>, vector<8x128xf32> -> vector<8x128xf32>
    %111 = arith.addf %109, %110 : vector<8x128xf32>
    %112 = vector.extract_strided_slice %111 {offsets = [0, 0], sizes = [8, 32], strides = [1, 1]} : vector<8x128xf32> to vector<8x32xf32>
    %113 = arith.negf %112 : vector<8x32xf32>
    %114 = math.exp %113 : vector<8x32xf32>
    %cst_33 = arith.constant 1.000000e+00 : f32
    %115 = vector.broadcast %cst_33 : f32 to vector<8x32xf32>
    %116 = arith.addf %115, %114 : vector<8x32xf32>
    %117 = arith.divf %115, %116 : vector<8x32xf32>
    %118 = vector.extract_strided_slice %111 {offsets = [0, 32], sizes = [8, 32], strides = [1, 1]} : vector<8x128xf32> to vector<8x32xf32>
    %119 = arith.negf %118 : vector<8x32xf32>
    %120 = math.exp %119 : vector<8x32xf32>
    %cst_34 = arith.constant 1.000000e+00 : f32
    %121 = vector.broadcast %cst_34 : f32 to vector<8x32xf32>
    %122 = arith.addf %121, %120 : vector<8x32xf32>
    %123 = arith.divf %121, %122 : vector<8x32xf32>
    %124 = vector.extract_strided_slice %111 {offsets = [0, 64], sizes = [8, 32], strides = [1, 1]} : vector<8x128xf32> to vector<8x32xf32>
    %125 = math.tanh %124 : vector<8x32xf32>
    %126 = vector.extract_strided_slice %111 {offsets = [0, 96], sizes = [8, 32], strides = [1, 1]} : vector<8x128xf32> to vector<8x32xf32>
    %127 = arith.negf %126 : vector<8x32xf32>
    %128 = math.exp %127 : vector<8x32xf32>
    %cst_35 = arith.constant 1.000000e+00 : f32
    %129 = vector.broadcast %cst_35 : f32 to vector<8x32xf32>
    %130 = arith.addf %129, %128 : vector<8x32xf32>
    %131 = arith.divf %129, %130 : vector<8x32xf32>
    %132 = arith.mulf %123, %86 : vector<8x32xf32>
    %133 = arith.mulf %117, %125 : vector<8x32xf32>
    %134 = arith.addf %132, %133 : vector<8x32xf32>
    %135 = math.tanh %134 : vector<8x32xf32>
    %136 = arith.mulf %131, %135 : vector<8x32xf32>
    %137 = vector.broadcast %4 : vector<1x32xf32> to vector<8x32xf32>
    %138 = arith.mulf %136, %137 : vector<8x32xf32>
    %cst_36 = arith.constant dense<0.000000e+00> : vector<8xf32>
    %139 = vector.multi_reduction <add>, %138, %cst_36 [1] : vector<8x32xf32> to vector<8xf32>
    %140 = vector.shape_cast %139 : vector<8xf32> to vector<8x1xf32>
    %141 = vector.broadcast %5 : vector<1x1xf32> to vector<8x1xf32>
    %142 = arith.addf %140, %141 : vector<8x1xf32>
    %143 = arith.maximumf %95, %142 : vector<8x1xf32>
    %144 = arith.subf %95, %143 : vector<8x1xf32>
    %145 = math.exp %144 : vector<8x1xf32>
    %146 = arith.subf %142, %143 : vector<8x1xf32>
    %147 = math.exp %146 : vector<8x1xf32>
    %148 = arith.mulf %145, %101 : vector<8x1xf32>
    %149 = arith.addf %148, %147 : vector<8x1xf32>
    %150 = vector.broadcast %145 : vector<8x1xf32> to vector<8x32xf32>
    %151 = arith.mulf %150, %106 : vector<8x32xf32>
    %152 = vector.broadcast %147 : vector<8x1xf32> to vector<8x32xf32>
    %153 = arith.mulf %152, %136 : vector<8x32xf32>
    %154 = arith.addf %151, %153 : vector<8x32xf32>
    %c3_i32 = arith.constant 3 : i32
    %155 = arith.index_cast %c3_i32 : i32 to index
    %c0_37 = arith.constant 0 : index
    %c0_38 = arith.constant 0 : index
    %156 = vector.load %arg2[%155, %c0_37, %c0_38] : memref<8x8x128xf32, #tpu.memory_space<vmem>>, vector<1x8x128xf32>
    %157 = vector.shape_cast %156 : vector<1x8x128xf32> to vector<8x128xf32>
    %cst_39 = arith.constant dense<0.000000e+00> : vector<8x128xf32>
    %158 = tpu.matmul %136, %3, %cst_39 {dimension_numbers = #tpu.dot_dimension_numbers<[1], [0], [0], [1], [0, 0, 1, 1], [], []>} : vector<8x32xf32>, vector<32x128xf32>, vector<8x128xf32> -> vector<8x128xf32>
    %159 = arith.addf %157, %158 : vector<8x128xf32>
    %160 = vector.extract_strided_slice %159 {offsets = [0, 0], sizes = [8, 32], strides = [1, 1]} : vector<8x128xf32> to vector<8x32xf32>
    %161 = arith.negf %160 : vector<8x32xf32>
    %162 = math.exp %161 : vector<8x32xf32>
    %cst_40 = arith.constant 1.000000e+00 : f32
    %163 = vector.broadcast %cst_40 : f32 to vector<8x32xf32>
    %164 = arith.addf %163, %162 : vector<8x32xf32>
    %165 = arith.divf %163, %164 : vector<8x32xf32>
    %166 = vector.extract_strided_slice %159 {offsets = [0, 32], sizes = [8, 32], strides = [1, 1]} : vector<8x128xf32> to vector<8x32xf32>
    %167 = arith.negf %166 : vector<8x32xf32>
    %168 = math.exp %167 : vector<8x32xf32>
    %cst_41 = arith.constant 1.000000e+00 : f32
    %169 = vector.broadcast %cst_41 : f32 to vector<8x32xf32>
    %170 = arith.addf %169, %168 : vector<8x32xf32>
    %171 = arith.divf %169, %170 : vector<8x32xf32>
    %172 = vector.extract_strided_slice %159 {offsets = [0, 64], sizes = [8, 32], strides = [1, 1]} : vector<8x128xf32> to vector<8x32xf32>
    %173 = math.tanh %172 : vector<8x32xf32>
    %174 = vector.extract_strided_slice %159 {offsets = [0, 96], sizes = [8, 32], strides = [1, 1]} : vector<8x128xf32> to vector<8x32xf32>
    %175 = arith.negf %174 : vector<8x32xf32>
    %176 = math.exp %175 : vector<8x32xf32>
    %cst_42 = arith.constant 1.000000e+00 : f32
    %177 = vector.broadcast %cst_42 : f32 to vector<8x32xf32>
    %178 = arith.addf %177, %176 : vector<8x32xf32>
    %179 = arith.divf %177, %178 : vector<8x32xf32>
    %180 = arith.mulf %171, %134 : vector<8x32xf32>
    %181 = arith.mulf %165, %173 : vector<8x32xf32>
    %182 = arith.addf %180, %181 : vector<8x32xf32>
    %183 = math.tanh %182 : vector<8x32xf32>
    %184 = arith.mulf %179, %183 : vector<8x32xf32>
    %185 = vector.broadcast %4 : vector<1x32xf32> to vector<8x32xf32>
    %186 = arith.mulf %184, %185 : vector<8x32xf32>
    %cst_43 = arith.constant dense<0.000000e+00> : vector<8xf32>
    %187 = vector.multi_reduction <add>, %186, %cst_43 [1] : vector<8x32xf32> to vector<8xf32>
    %188 = vector.shape_cast %187 : vector<8xf32> to vector<8x1xf32>
    %189 = vector.broadcast %5 : vector<1x1xf32> to vector<8x1xf32>
    %190 = arith.addf %188, %189 : vector<8x1xf32>
    %191 = arith.maximumf %143, %190 : vector<8x1xf32>
    %192 = arith.subf %143, %191 : vector<8x1xf32>
    %193 = math.exp %192 : vector<8x1xf32>
    %194 = arith.subf %190, %191 : vector<8x1xf32>
    %195 = math.exp %194 : vector<8x1xf32>
    %196 = arith.mulf %193, %149 : vector<8x1xf32>
    %197 = arith.addf %196, %195 : vector<8x1xf32>
    %198 = vector.broadcast %193 : vector<8x1xf32> to vector<8x32xf32>
    %199 = arith.mulf %198, %154 : vector<8x32xf32>
    %200 = vector.broadcast %195 : vector<8x1xf32> to vector<8x32xf32>
    %201 = arith.mulf %200, %184 : vector<8x32xf32>
    %202 = arith.addf %199, %201 : vector<8x32xf32>
    %c4_i32 = arith.constant 4 : i32
    %203 = arith.index_cast %c4_i32 : i32 to index
    %c0_44 = arith.constant 0 : index
    %c0_45 = arith.constant 0 : index
    %204 = vector.load %arg2[%203, %c0_44, %c0_45] : memref<8x8x128xf32, #tpu.memory_space<vmem>>, vector<1x8x128xf32>
    %205 = vector.shape_cast %204 : vector<1x8x128xf32> to vector<8x128xf32>
    %cst_46 = arith.constant dense<0.000000e+00> : vector<8x128xf32>
    %206 = tpu.matmul %184, %3, %cst_46 {dimension_numbers = #tpu.dot_dimension_numbers<[1], [0], [0], [1], [0, 0, 1, 1], [], []>} : vector<8x32xf32>, vector<32x128xf32>, vector<8x128xf32> -> vector<8x128xf32>
    %207 = arith.addf %205, %206 : vector<8x128xf32>
    %208 = vector.extract_strided_slice %207 {offsets = [0, 0], sizes = [8, 32], strides = [1, 1]} : vector<8x128xf32> to vector<8x32xf32>
    %209 = arith.negf %208 : vector<8x32xf32>
    %210 = math.exp %209 : vector<8x32xf32>
    %cst_47 = arith.constant 1.000000e+00 : f32
    %211 = vector.broadcast %cst_47 : f32 to vector<8x32xf32>
    %212 = arith.addf %211, %210 : vector<8x32xf32>
    %213 = arith.divf %211, %212 : vector<8x32xf32>
    %214 = vector.extract_strided_slice %207 {offsets = [0, 32], sizes = [8, 32], strides = [1, 1]} : vector<8x128xf32> to vector<8x32xf32>
    %215 = arith.negf %214 : vector<8x32xf32>
    %216 = math.exp %215 : vector<8x32xf32>
    %cst_48 = arith.constant 1.000000e+00 : f32
    %217 = vector.broadcast %cst_48 : f32 to vector<8x32xf32>
    %218 = arith.addf %217, %216 : vector<8x32xf32>
    %219 = arith.divf %217, %218 : vector<8x32xf32>
    %220 = vector.extract_strided_slice %207 {offsets = [0, 64], sizes = [8, 32], strides = [1, 1]} : vector<8x128xf32> to vector<8x32xf32>
    %221 = math.tanh %220 : vector<8x32xf32>
    %222 = vector.extract_strided_slice %207 {offsets = [0, 96], sizes = [8, 32], strides = [1, 1]} : vector<8x128xf32> to vector<8x32xf32>
    %223 = arith.negf %222 : vector<8x32xf32>
    %224 = math.exp %223 : vector<8x32xf32>
    %cst_49 = arith.constant 1.000000e+00 : f32
    %225 = vector.broadcast %cst_49 : f32 to vector<8x32xf32>
    %226 = arith.addf %225, %224 : vector<8x32xf32>
    %227 = arith.divf %225, %226 : vector<8x32xf32>
    %228 = arith.mulf %219, %182 : vector<8x32xf32>
    %229 = arith.mulf %213, %221 : vector<8x32xf32>
    %230 = arith.addf %228, %229 : vector<8x32xf32>
    %231 = math.tanh %230 : vector<8x32xf32>
    %232 = arith.mulf %227, %231 : vector<8x32xf32>
    %233 = vector.broadcast %4 : vector<1x32xf32> to vector<8x32xf32>
    %234 = arith.mulf %232, %233 : vector<8x32xf32>
    %cst_50 = arith.constant dense<0.000000e+00> : vector<8xf32>
    %235 = vector.multi_reduction <add>, %234, %cst_50 [1] : vector<8x32xf32> to vector<8xf32>
    %236 = vector.shape_cast %235 : vector<8xf32> to vector<8x1xf32>
    %237 = vector.broadcast %5 : vector<1x1xf32> to vector<8x1xf32>
    %238 = arith.addf %236, %237 : vector<8x1xf32>
    %239 = arith.maximumf %191, %238 : vector<8x1xf32>
    %240 = arith.subf %191, %239 : vector<8x1xf32>
    %241 = math.exp %240 : vector<8x1xf32>
    %242 = arith.subf %238, %239 : vector<8x1xf32>
    %243 = math.exp %242 : vector<8x1xf32>
    %244 = arith.mulf %241, %197 : vector<8x1xf32>
    %245 = arith.addf %244, %243 : vector<8x1xf32>
    %246 = vector.broadcast %241 : vector<8x1xf32> to vector<8x32xf32>
    %247 = arith.mulf %246, %202 : vector<8x32xf32>
    %248 = vector.broadcast %243 : vector<8x1xf32> to vector<8x32xf32>
    %249 = arith.mulf %248, %232 : vector<8x32xf32>
    %250 = arith.addf %247, %249 : vector<8x32xf32>
    %c5_i32 = arith.constant 5 : i32
    %251 = arith.index_cast %c5_i32 : i32 to index
    %c0_51 = arith.constant 0 : index
    %c0_52 = arith.constant 0 : index
    %252 = vector.load %arg2[%251, %c0_51, %c0_52] : memref<8x8x128xf32, #tpu.memory_space<vmem>>, vector<1x8x128xf32>
    %253 = vector.shape_cast %252 : vector<1x8x128xf32> to vector<8x128xf32>
    %cst_53 = arith.constant dense<0.000000e+00> : vector<8x128xf32>
    %254 = tpu.matmul %232, %3, %cst_53 {dimension_numbers = #tpu.dot_dimension_numbers<[1], [0], [0], [1], [0, 0, 1, 1], [], []>} : vector<8x32xf32>, vector<32x128xf32>, vector<8x128xf32> -> vector<8x128xf32>
    %255 = arith.addf %253, %254 : vector<8x128xf32>
    %256 = vector.extract_strided_slice %255 {offsets = [0, 0], sizes = [8, 32], strides = [1, 1]} : vector<8x128xf32> to vector<8x32xf32>
    %257 = arith.negf %256 : vector<8x32xf32>
    %258 = math.exp %257 : vector<8x32xf32>
    %cst_54 = arith.constant 1.000000e+00 : f32
    %259 = vector.broadcast %cst_54 : f32 to vector<8x32xf32>
    %260 = arith.addf %259, %258 : vector<8x32xf32>
    %261 = arith.divf %259, %260 : vector<8x32xf32>
    %262 = vector.extract_strided_slice %255 {offsets = [0, 32], sizes = [8, 32], strides = [1, 1]} : vector<8x128xf32> to vector<8x32xf32>
    %263 = arith.negf %262 : vector<8x32xf32>
    %264 = math.exp %263 : vector<8x32xf32>
    %cst_55 = arith.constant 1.000000e+00 : f32
    %265 = vector.broadcast %cst_55 : f32 to vector<8x32xf32>
    %266 = arith.addf %265, %264 : vector<8x32xf32>
    %267 = arith.divf %265, %266 : vector<8x32xf32>
    %268 = vector.extract_strided_slice %255 {offsets = [0, 64], sizes = [8, 32], strides = [1, 1]} : vector<8x128xf32> to vector<8x32xf32>
    %269 = math.tanh %268 : vector<8x32xf32>
    %270 = vector.extract_strided_slice %255 {offsets = [0, 96], sizes = [8, 32], strides = [1, 1]} : vector<8x128xf32> to vector<8x32xf32>
    %271 = arith.negf %270 : vector<8x32xf32>
    %272 = math.exp %271 : vector<8x32xf32>
    %cst_56 = arith.constant 1.000000e+00 : f32
    %273 = vector.broadcast %cst_56 : f32 to vector<8x32xf32>
    %274 = arith.addf %273, %272 : vector<8x32xf32>
    %275 = arith.divf %273, %274 : vector<8x32xf32>
    %276 = arith.mulf %267, %230 : vector<8x32xf32>
    %277 = arith.mulf %261, %269 : vector<8x32xf32>
    %278 = arith.addf %276, %277 : vector<8x32xf32>
    %279 = math.tanh %278 : vector<8x32xf32>
    %280 = arith.mulf %275, %279 : vector<8x32xf32>
    %281 = vector.broadcast %4 : vector<1x32xf32> to vector<8x32xf32>
    %282 = arith.mulf %280, %281 : vector<8x32xf32>
    %cst_57 = arith.constant dense<0.000000e+00> : vector<8xf32>
    %283 = vector.multi_reduction <add>, %282, %cst_57 [1] : vector<8x32xf32> to vector<8xf32>
    %284 = vector.shape_cast %283 : vector<8xf32> to vector<8x1xf32>
    %285 = vector.broadcast %5 : vector<1x1xf32> to vector<8x1xf32>
    %286 = arith.addf %284, %285 : vector<8x1xf32>
    %287 = arith.maximumf %239, %286 : vector<8x1xf32>
    %288 = arith.subf %239, %287 : vector<8x1xf32>
    %289 = math.exp %288 : vector<8x1xf32>
    %290 = arith.subf %286, %287 : vector<8x1xf32>
    %291 = math.exp %290 : vector<8x1xf32>
    %292 = arith.mulf %289, %245 : vector<8x1xf32>
    %293 = arith.addf %292, %291 : vector<8x1xf32>
    %294 = vector.broadcast %289 : vector<8x1xf32> to vector<8x32xf32>
    %295 = arith.mulf %294, %250 : vector<8x32xf32>
    %296 = vector.broadcast %291 : vector<8x1xf32> to vector<8x32xf32>
    %297 = arith.mulf %296, %280 : vector<8x32xf32>
    %298 = arith.addf %295, %297 : vector<8x32xf32>
    %c6_i32 = arith.constant 6 : i32
    %299 = arith.index_cast %c6_i32 : i32 to index
    %c0_58 = arith.constant 0 : index
    %c0_59 = arith.constant 0 : index
    %300 = vector.load %arg2[%299, %c0_58, %c0_59] : memref<8x8x128xf32, #tpu.memory_space<vmem>>, vector<1x8x128xf32>
    %301 = vector.shape_cast %300 : vector<1x8x128xf32> to vector<8x128xf32>
    %cst_60 = arith.constant dense<0.000000e+00> : vector<8x128xf32>
    %302 = tpu.matmul %280, %3, %cst_60 {dimension_numbers = #tpu.dot_dimension_numbers<[1], [0], [0], [1], [0, 0, 1, 1], [], []>} : vector<8x32xf32>, vector<32x128xf32>, vector<8x128xf32> -> vector<8x128xf32>
    %303 = arith.addf %301, %302 : vector<8x128xf32>
    %304 = vector.extract_strided_slice %303 {offsets = [0, 0], sizes = [8, 32], strides = [1, 1]} : vector<8x128xf32> to vector<8x32xf32>
    %305 = arith.negf %304 : vector<8x32xf32>
    %306 = math.exp %305 : vector<8x32xf32>
    %cst_61 = arith.constant 1.000000e+00 : f32
    %307 = vector.broadcast %cst_61 : f32 to vector<8x32xf32>
    %308 = arith.addf %307, %306 : vector<8x32xf32>
    %309 = arith.divf %307, %308 : vector<8x32xf32>
    %310 = vector.extract_strided_slice %303 {offsets = [0, 32], sizes = [8, 32], strides = [1, 1]} : vector<8x128xf32> to vector<8x32xf32>
    %311 = arith.negf %310 : vector<8x32xf32>
    %312 = math.exp %311 : vector<8x32xf32>
    %cst_62 = arith.constant 1.000000e+00 : f32
    %313 = vector.broadcast %cst_62 : f32 to vector<8x32xf32>
    %314 = arith.addf %313, %312 : vector<8x32xf32>
    %315 = arith.divf %313, %314 : vector<8x32xf32>
    %316 = vector.extract_strided_slice %303 {offsets = [0, 64], sizes = [8, 32], strides = [1, 1]} : vector<8x128xf32> to vector<8x32xf32>
    %317 = math.tanh %316 : vector<8x32xf32>
    %318 = vector.extract_strided_slice %303 {offsets = [0, 96], sizes = [8, 32], strides = [1, 1]} : vector<8x128xf32> to vector<8x32xf32>
    %319 = arith.negf %318 : vector<8x32xf32>
    %320 = math.exp %319 : vector<8x32xf32>
    %cst_63 = arith.constant 1.000000e+00 : f32
    %321 = vector.broadcast %cst_63 : f32 to vector<8x32xf32>
    %322 = arith.addf %321, %320 : vector<8x32xf32>
    %323 = arith.divf %321, %322 : vector<8x32xf32>
    %324 = arith.mulf %315, %278 : vector<8x32xf32>
    %325 = arith.mulf %309, %317 : vector<8x32xf32>
    %326 = arith.addf %324, %325 : vector<8x32xf32>
    %327 = math.tanh %326 : vector<8x32xf32>
    %328 = arith.mulf %323, %327 : vector<8x32xf32>
    %329 = vector.broadcast %4 : vector<1x32xf32> to vector<8x32xf32>
    %330 = arith.mulf %328, %329 : vector<8x32xf32>
    %cst_64 = arith.constant dense<0.000000e+00> : vector<8xf32>
    %331 = vector.multi_reduction <add>, %330, %cst_64 [1] : vector<8x32xf32> to vector<8xf32>
    %332 = vector.shape_cast %331 : vector<8xf32> to vector<8x1xf32>
    %333 = vector.broadcast %5 : vector<1x1xf32> to vector<8x1xf32>
    %334 = arith.addf %332, %333 : vector<8x1xf32>
    %335 = arith.maximumf %287, %334 : vector<8x1xf32>
    %336 = arith.subf %287, %335 : vector<8x1xf32>
    %337 = math.exp %336 : vector<8x1xf32>
    %338 = arith.subf %334, %335 : vector<8x1xf32>
    %339 = math.exp %338 : vector<8x1xf32>
    %340 = arith.mulf %337, %293 : vector<8x1xf32>
    %341 = arith.addf %340, %339 : vector<8x1xf32>
    %342 = vector.broadcast %337 : vector<8x1xf32> to vector<8x32xf32>
    %343 = arith.mulf %342, %298 : vector<8x32xf32>
    %344 = vector.broadcast %339 : vector<8x1xf32> to vector<8x32xf32>
    %345 = arith.mulf %344, %328 : vector<8x32xf32>
    %346 = arith.addf %343, %345 : vector<8x32xf32>
    %c7_i32 = arith.constant 7 : i32
    %347 = arith.index_cast %c7_i32 : i32 to index
    %c0_65 = arith.constant 0 : index
    %c0_66 = arith.constant 0 : index
    %348 = vector.load %arg2[%347, %c0_65, %c0_66] : memref<8x8x128xf32, #tpu.memory_space<vmem>>, vector<1x8x128xf32>
    %349 = vector.shape_cast %348 : vector<1x8x128xf32> to vector<8x128xf32>
    %cst_67 = arith.constant dense<0.000000e+00> : vector<8x128xf32>
    %350 = tpu.matmul %328, %3, %cst_67 {dimension_numbers = #tpu.dot_dimension_numbers<[1], [0], [0], [1], [0, 0, 1, 1], [], []>} : vector<8x32xf32>, vector<32x128xf32>, vector<8x128xf32> -> vector<8x128xf32>
    %351 = arith.addf %349, %350 : vector<8x128xf32>
    %352 = vector.extract_strided_slice %351 {offsets = [0, 0], sizes = [8, 32], strides = [1, 1]} : vector<8x128xf32> to vector<8x32xf32>
    %353 = arith.negf %352 : vector<8x32xf32>
    %354 = math.exp %353 : vector<8x32xf32>
    %cst_68 = arith.constant 1.000000e+00 : f32
    %355 = vector.broadcast %cst_68 : f32 to vector<8x32xf32>
    %356 = arith.addf %355, %354 : vector<8x32xf32>
    %357 = arith.divf %355, %356 : vector<8x32xf32>
    %358 = vector.extract_strided_slice %351 {offsets = [0, 32], sizes = [8, 32], strides = [1, 1]} : vector<8x128xf32> to vector<8x32xf32>
    %359 = arith.negf %358 : vector<8x32xf32>
    %360 = math.exp %359 : vector<8x32xf32>
    %cst_69 = arith.constant 1.000000e+00 : f32
    %361 = vector.broadcast %cst_69 : f32 to vector<8x32xf32>
    %362 = arith.addf %361, %360 : vector<8x32xf32>
    %363 = arith.divf %361, %362 : vector<8x32xf32>
    %364 = vector.extract_strided_slice %351 {offsets = [0, 64], sizes = [8, 32], strides = [1, 1]} : vector<8x128xf32> to vector<8x32xf32>
    %365 = math.tanh %364 : vector<8x32xf32>
    %366 = vector.extract_strided_slice %351 {offsets = [0, 96], sizes = [8, 32], strides = [1, 1]} : vector<8x128xf32> to vector<8x32xf32>
    %367 = arith.negf %366 : vector<8x32xf32>
    %368 = math.exp %367 : vector<8x32xf32>
    %cst_70 = arith.constant 1.000000e+00 : f32
    %369 = vector.broadcast %cst_70 : f32 to vector<8x32xf32>
    %370 = arith.addf %369, %368 : vector<8x32xf32>
    %371 = arith.divf %369, %370 : vector<8x32xf32>
    %372 = arith.mulf %363, %326 : vector<8x32xf32>
    %373 = arith.mulf %357, %365 : vector<8x32xf32>
    %374 = arith.addf %372, %373 : vector<8x32xf32>
    %375 = math.tanh %374 : vector<8x32xf32>
    %376 = arith.mulf %371, %375 : vector<8x32xf32>
    %377 = vector.broadcast %4 : vector<1x32xf32> to vector<8x32xf32>
    %378 = arith.mulf %376, %377 : vector<8x32xf32>
    %cst_71 = arith.constant dense<0.000000e+00> : vector<8xf32>
    %379 = vector.multi_reduction <add>, %378, %cst_71 [1] : vector<8x32xf32> to vector<8xf32>
    %380 = vector.shape_cast %379 : vector<8xf32> to vector<8x1xf32>
    %381 = vector.broadcast %5 : vector<1x1xf32> to vector<8x1xf32>
    %382 = arith.addf %380, %381 : vector<8x1xf32>
    %383 = arith.maximumf %335, %382 : vector<8x1xf32>
    %384 = arith.subf %335, %383 : vector<8x1xf32>
    %385 = math.exp %384 : vector<8x1xf32>
    %386 = arith.subf %382, %383 : vector<8x1xf32>
    %387 = math.exp %386 : vector<8x1xf32>
    %388 = arith.mulf %385, %341 : vector<8x1xf32>
    %389 = arith.addf %388, %387 : vector<8x1xf32>
    %390 = vector.broadcast %385 : vector<8x1xf32> to vector<8x32xf32>
    %391 = arith.mulf %390, %346 : vector<8x32xf32>
    %392 = vector.broadcast %387 : vector<8x1xf32> to vector<8x32xf32>
    %393 = arith.mulf %392, %376 : vector<8x32xf32>
    %394 = arith.addf %391, %393 : vector<8x32xf32>
    %c8_i32 = arith.constant 8 : i32
    %c0_72 = arith.constant 0 : index
    %c0_73 = arith.constant 0 : index
    %395 = vector.load %arg7[%c0_72, %c0_73] : memref<8x32xf32, #tpu.memory_space<vmem>>, vector<8x32xf32>
    tpu.vector_store %arg7[%c0_72, %c0_73], %376 {strides = array<i32>} : memref<8x32xf32, #tpu.memory_space<vmem>>, vector<8x32xf32>,
    %c0_74 = arith.constant 0 : index
    %c0_75 = arith.constant 0 : index
    %396 = vector.load %arg8[%c0_74, %c0_75] : memref<8x32xf32, #tpu.memory_space<vmem>>, vector<8x32xf32>
    tpu.vector_store %arg8[%c0_74, %c0_75], %374 {strides = array<i32>} : memref<8x32xf32, #tpu.memory_space<vmem>>, vector<8x32xf32>,
    %c0_76 = arith.constant 0 : index
    %c0_77 = arith.constant 0 : index
    %397 = vector.load %arg9[%c0_76, %c0_77] : memref<8x1xf32, #tpu.memory_space<vmem>>, vector<8x1xf32>
    tpu.vector_store %arg9[%c0_76, %c0_77], %383 {strides = array<i32>} : memref<8x1xf32, #tpu.memory_space<vmem>>, vector<8x1xf32>,
    %c0_78 = arith.constant 0 : index
    %c0_79 = arith.constant 0 : index
    %398 = vector.load %arg10[%c0_78, %c0_79] : memref<8x1xf32, #tpu.memory_space<vmem>>, vector<8x1xf32>
    tpu.vector_store %arg10[%c0_78, %c0_79], %389 {strides = array<i32>} : memref<8x1xf32, #tpu.memory_space<vmem>>, vector<8x1xf32>,
    %c0_80 = arith.constant 0 : index
    %c0_81 = arith.constant 0 : index
    %399 = vector.load %arg11[%c0_80, %c0_81] : memref<8x32xf32, #tpu.memory_space<vmem>>, vector<8x32xf32>
    tpu.vector_store %arg11[%c0_80, %c0_81], %394 {strides = array<i32>} : memref<8x32xf32, #tpu.memory_space<vmem>>, vector<8x32xf32>,
    %c0_i32_82 = arith.constant 0 : i32
    %400 = arith.cmpi eq, %arg1, %c0_i32_82 : i32
    %401 = arith.extui %400 : i1 to i32
    %c0_i32_83 = arith.constant 0 : i32
    %402 = arith.cmpi ne, %401, %c0_i32_83 : i32
    scf.if %402 {
      %403 = tpu.reciprocal %389 : vector<8x1xf32> -> vector<8x1xf32>
      %404 = vector.broadcast %403 : vector<8x1xf32> to vector<8x32xf32>
      %405 = arith.mulf %394, %404 : vector<8x32xf32>
      %c0_84 = arith.constant 0 : index
      %c0_85 = arith.constant 0 : index
      %406 = vector.load %arg6[%c0_84, %c0_85] : memref<8x32xf32, #tpu.memory_space<vmem>>, vector<8x32xf32>
      tpu.vector_store %arg6[%c0_84, %c0_85], %405 {strides = array<i32>} : memref<8x32xf32, #tpu.memory_space<vmem>>, vector<8x32xf32>,
    } else {
    }
    return
  }
  func.func @transform_0(%arg0: i32, %arg1: i32) -> (i32, i32, i32) {
    %c0_i32 = arith.constant 0 : i32
    %c0_i32_0 = arith.constant 0 : i32
    return %arg1, %arg0, %c0_i32 : i32, i32, i32
  }
  func.func @transform_1(%arg0: i32, %arg1: i32) -> (i32, i32) {
    %c0_i32 = arith.constant 0 : i32
    %c0_i32_0 = arith.constant 0 : i32
    %c0_i32_1 = arith.constant 0 : i32
    return %c0_i32, %c0_i32_0 : i32, i32
  }
  func.func @transform_2(%arg0: i32, %arg1: i32) -> (i32, i32) {
    %c0_i32 = arith.constant 0 : i32
    %c0_i32_0 = arith.constant 0 : i32
    %c0_i32_1 = arith.constant 0 : i32
    return %c0_i32, %c0_i32_0 : i32, i32
  }
  func.func @transform_3(%arg0: i32, %arg1: i32) -> (i32, i32) {
    %c0_i32 = arith.constant 0 : i32
    %c0_i32_0 = arith.constant 0 : i32
    %c0_i32_1 = arith.constant 0 : i32
    return %c0_i32, %c0_i32_0 : i32, i32
  }
  func.func @transform_4(%arg0: i32, %arg1: i32) -> (i32, i32) {
    %c0_i32 = arith.constant 0 : i32
    %c0_i32_0 = arith.constant 0 : i32
    return %arg0, %c0_i32 : i32, i32
  }
}

</mosaic_0001>

<llo_original>
// kernel: lstm_with_attention.1
$region0: #{lstm_with_attention.1}
  #allocation0 [shape = 'u32[]', space=smem, size = 0x4, offset = 0x4, fixed_abs, tag = 'smem constant byte address 0x4 - core index']
  #allocation1 [shape = 'u32[144,128]{1,0:T(1,128)}', space=vmem, size = 0x12000, scoped, tag = 'internal scratch']
  #allocation2 [shape = 'f32[8,32]{1,0:T(8,128)}', space=vmem, size = 0x1000, scoped, tag = 'scratch operand']
  #allocation3 [shape = 'f32[8,32]{1,0:T(8,128)}', space=vmem, size = 0x1000, scoped, tag = 'scratch operand']
  #allocation4 [shape = 'f32[8,1]{1,0:T(8,128)}', space=vmem, size = 0x1000, scoped, tag = 'scratch operand']
  #allocation5 [shape = 'f32[8,1]{1,0:T(8,128)}', space=vmem, size = 0x1000, scoped, tag = 'scratch operand']
  #allocation6 [shape = 'f32[8,32]{1,0:T(8,128)}', space=vmem, size = 0x1000, scoped, tag = 'scratch operand']
  #allocation7 [shape = 'f32[1,1]{1,0:T(1,128)S(1)}', space=vmem, size = 0x200, scoped, tag = 'scoped memory for lstm_with_attention.1']
  %s0 = inlined_call_operand.vmem [shape: f32[8,8,128], index: 0, kind: input, shape index: {}]
  %s1 = inlined_call_operand.vmem [shape: f32[32,128], index: 1, kind: input, shape index: {}]
  %s2 = inlined_call_operand.vmem [shape: f32[1,32], index: 2, kind: input, shape index: {}]
  %s3 = inlined_call_operand.<no memory space> [shape: f32[1,1], index: 3, kind: input, shape index: {}]
  %s4 = inlined_call_operand.vmem [shape: f32[8,32], index: 4, kind: output, shape index: {}]
  %s5 = sld [smem:[#allocation0]]
  $region34: #{lstm_with_attention.1} parent=0
    _
  %s7 = ssub.s32 1, %s5
  %s8 = scalar_select 0, %s7, %s5
  %v9 = vstv %s3
  %10 = vst [vmem:[#allocation7] sm:$0x1] %v9
  // Predicated region
  $region2: #{lstm_with_attention.1} parent=0 // pred_check
    _
  $region3: #{lstm_with_attention.1} parent=0 // pred_check_branch
    %12 = sbr.rel (0) target = $region5
  $region4: #{lstm_with_attention.1} parent=0 // pred_region
    _
  $region5: #{lstm_with_attention.1} parent=0 // pred_fallthru
    _
  // Predicated region
  $region6: #{lstm_with_attention.1} parent=0 // pred_check
    _
  $region7: #{lstm_with_attention.1} parent=0 // pred_check_branch
    %14 = sbr.rel (0) target = $region9
  $region8: #{lstm_with_attention.1} parent=0 // pred_region
    _
  $region9: #{lstm_with_attention.1} parent=0 // pred_fallthru
    _
  // Predicated region
  $region10: #{lstm_with_attention.1} parent=0 // pred_check
    _
  $region11: #{lstm_with_attention.1} parent=0 // pred_check_branch
    %16 = sbr.rel (0) target = $region13
  $region12: #{lstm_with_attention.1} parent=0 // pred_region
    _
  $region13: #{lstm_with_attention.1} parent=0 // pred_fallthru
    _
  // Predicated region
  $region14: #{lstm_with_attention.1} parent=0 // pred_check
    _
  $region15: #{lstm_with_attention.1} parent=0 // pred_check_branch
    %18 = sbr.rel (0) target = $region17
  $region16: #{lstm_with_attention.1} parent=0 // pred_region
    _
  $region17: #{lstm_with_attention.1} parent=0 // pred_fallthru
    _
  %p19 = scmp.eq.s32.totalorder 0, 0
  // Predicated region
  $region18: #{lstm_with_attention.1} parent=0 // pred_check
    %p20 = pneg %p19
  $region19: #{lstm_with_attention.1} parent=0 // pred_check_branch
    %22 = sbr.rel (%p20) target = $region21
  $region20: #{lstm_with_attention.1} parent=0 // pred_region
    %vm23 = vcmask 261120
    %24 = vst.msk [vmem:[#allocation2] sm:$0xff] %vm23, 0.0
    %25 = vst.msk [vmem:[#allocation3] sm:$0xff] %vm23, 0.0
    %vm26 = vcmask 7168
    %27 = vst.msk [vmem:[#allocation4] sm:$0xff] %vm26, -inf
    %28 = vst.msk [vmem:[#allocation5] sm:$0xff] %vm26, 0.0
    %29 = vst.msk [vmem:[#allocation6] sm:$0xff] %vm23, 0.0
  $region21: #{lstm_with_attention.1} parent=0 // pred_fallthru
    _
  %v30 = vld [vmem:[%s1] sm:$0xff]
  %v31 = vld [vmem:[%s1 + $0x8] sm:$0xff]
  %v32 = vld [vmem:[%s1 + $0x10] sm:$0xff]
  %v33 = vld [vmem:[%s1 + $0x18] sm:$0xff]
  %v34 = vld [vmem:[%s2] sm:$0x1]
  %v35 = vld [vmem:[#allocation7] sm:$0x1]
  %v36 = vld [vmem:[#allocation2] sm:$0xff]
  %v37 = vld [vmem:[#allocation3] sm:$0xff]
  %v38 = vld [vmem:[#allocation4] sm:$0xff]
  %v39 = vld [vmem:[#allocation5] sm:$0xff]
  %v40 = vld [vmem:[#allocation6] sm:$0xff]
  %v41 = vld [vmem:[%s0] sm:$0xff]
  %vm42 = vcmask 261120
  %v44 = vsel %vm42, %v36, 0
  %46 = vmatprep.subr.mxu0 0.0
  %47 = vmatpush1.msra.mxu0 0.0
  %48 = vmatprep.subr.mxu0 0.0
  %49 = vmatpush1.msra.mxu0 0.0
  %50 = vmatprep.subr.mxu0 0.0
  %51 = vmatpush1.msra.mxu0 0.0
  %52 = vmatprep.subr.mxu0 0.0
  %53 = vmatpush1.msra.mxu0 0.0
  %54 = vmatprep.subr.mxu0 0.0
  %55 = vmatpush1.msra.mxu0 0.0
  %56 = vmatprep.subr.mxu0 0.0
  %57 = vmatpush1.msra.mxu0 0.0
  %58 = vmatprep.subr.mxu0 0.0
  %59 = vmatpush1.msra.mxu0 0.0
  %60 = vmatprep.subr.mxu0 0.0
  %61 = vmatpush1.msra.mxu0 0.0
  %62 = vmatprep.subr.mxu0 0.0
  %63 = vmatpush1.msra.mxu0 0.0
  %64 = vmatprep.subr.mxu0 0.0
  %65 = vmatpush1.msra.mxu0 0.0
  %66 = vmatprep.subr.mxu0 0.0
  %67 = vmatpush1.msra.mxu0 0.0
  %68 = vmatprep.subr.mxu0 0.0
  %69 = vmatpush1.msra.mxu0 0.0
  %70 = vmatprep.subr.mxu0 0.0
  %71 = vmatpush1.msra.mxu0 %v33
  %72 = vmatprep.subr.mxu0 0.0
  %73 = vmatpush1.msra.mxu0 %v32
  %74 = vmatprep.subr.mxu0 0.0
  %75 = vmatpush1.msra.mxu0 %v31
  %76 = vmatprep.subr.mxu0 0.0
  %77 = vmatpush1.msra.mxu0 %v30
  %78 = vmatprep.subr.mxu0 0.0
  %79 = vmatpush2.msra.mxu0 0.0
  %80 = vmatprep.subr.mxu0 0.0
  %81 = vmatpush2.msra.mxu0 0.0
  %82 = vmatprep.subr.mxu0 0.0
  %83 = vmatpush2.msra.mxu0 0.0
  %84 = vmatprep.subr.mxu0 0.0
  %85 = vmatpush2.msra.mxu0 0.0
  %86 = vmatprep.subr.mxu0 0.0
  %87 = vmatpush2.msra.mxu0 0.0
  %88 = vmatprep.subr.mxu0 0.0
  %89 = vmatpush2.msra.mxu0 0.0
  %90 = vmatprep.subr.mxu0 0.0
  %91 = vmatpush2.msra.mxu0 0.0
  %92 = vmatprep.subr.mxu0 0.0
  %93 = vmatpush2.msra.mxu0 0.0
  %94 = vmatprep.subr.mxu0 0.0
  %95 = vmatpush2.msra.mxu0 0.0
  %96 = vmatprep.subr.mxu0 0.0
  %97 = vmatpush2.msra.mxu0 0.0
  %98 = vmatprep.subr.mxu0 0.0
  %99 = vmatpush2.msra.mxu0 0.0
  %100 = vmatprep.subr.mxu0 0.0
  %101 = vmatpush2.msra.mxu0 0.0
  %102 = vmatprep.subr.mxu0 0.0
  %103 = vmatpush2.msra.mxu0 0.0
  %104 = vmatprep.subr.mxu0 0.0
  %105 = vmatpush2.msra.mxu0 0.0
  %106 = vmatprep.subr.mxu0 0.0
  %107 = vmatpush2.msra.mxu0 0.0
  %108 = vmatprep.subr.mxu0 0.0
  %109 = vmatpush2.msra.mxu0 0.0
  %110 = vmatprep.mubr.f32.mxu0 0.0
  %111 = vmatmul.mubr.f32.gmra.mxu0 %v44
  %v112 = vpop.f32.mrf.mxu0
  %v113 = vadd.f32 0.0, %v112
  %v114 = vpop.f32.mrf.mxu0
  %115 = vdwg.mxu0
  %v116 = vadd.f32 %v41, %v113
  %v117 = vxor.u32 %v116, 2147483648
  %v118 = vmul.f32 %v117, 1.442695
  %v119 = vpow.pop %v118
  %v120 = vadd.f32 %v119, 1.0
  %v121 = vrcp.pop %v120
  %v122 = vmul.f32 1.0, %v121
  %v123 = vtanh.pop %v116
  %125 = vrot.lane.b32.xlu0 %v37, 32
  %v126 = vpop.permute.xlu0 %125
  %v128 = vmul.f32 %v122, %v126
  %130 = vrot.lane.b32.xlu0 %v123, 64
  %v131 = vpop.permute.xlu0 %130
  %v133 = vmul.f32 %v122, %v131
  %135 = vrot.lane.b32.xlu0 %v133, 32
  %v136 = vpop.permute.xlu0 %135
  %v138 = vadd.f32 %v128, %v136
  %v139 = vtanh.pop %v138
  %141 = vrot.lane.b32.xlu0 %v139, 64
  %v142 = vpop.permute.xlu0 %141
  %v144 = vmul.f32 %v122, %v142
  %v146 = vlaneseq
  %v147 = vshrl.u32 %v146, 7
  %v148 = vsub.s32 0, %v147
  %v149 = vrot.slane %v34, %v148
  %150 = vrot.lane.b32.xlu0 %v149, 96
  %v151 = vpop.permute.xlu0 %150
  %v153 = vmul.f32 %v144, %v151
  %155 = vrot.lane.b32.xlu0 %v153, 32
  %v156 = vpop.permute.xlu0 %155
  %v158 = vsel %vm42, %v156, 0.0
  %159 = vadd.xlane.f32.xlu0 %v158
  %v160 = vpop.xlane.xlu0 %159
  %v162 = vlaneseq
  %v163 = vshrl.u32 %v162, 7
  %v164 = vsub.s32 0, %v163
  %v165 = vrot.slane %v35, %v164
  %v167 = vadd.f32 %v160, %v165
  %v168 = vmax.f32 %v38, %v167
  %v169 = vsub.f32 %v38, %v168
  %v170 = vmul.f32 %v169, 1.442695
  %v171 = vpow.pop %v170
  %v172 = vsub.f32 %v167, %v168
  %v173 = vmul.f32 %v172, 1.442695
  %v174 = vpow.pop %v173
  %v175 = vmul.f32 %v171, %v39
  %v176 = vadd.f32 %v175, %v174
  %178 = vset.pattern.permute.xlu0 0
  %179 = vperm.xlu0 %178, %v171
  %v180 = vpop.permute.xlu0 %179
  %v182 = vmul.f32 %v180, %v40
  %184 = vset.pattern.permute.xlu0 0
  %185 = vperm.xlu0 %184, %v174
  %v186 = vpop.permute.xlu0 %185
  %v188 = vmul.f32 %v186, %v144
  %190 = vrot.lane.b32.xlu0 %v188, 32
  %v191 = vpop.permute.xlu0 %190
  %v193 = vadd.f32 %v182, %v191
  %s194 = scalar_lea.vmem %s0, 8
  %v195 = vld [vmem:[%s194] sm:$0xff]
  %197 = vrot.lane.b32.xlu0 %v144, 32
  %v198 = vpop.permute.xlu0 %197
  %v199 = vsel %vm42, %v198, 0
  %201 = vmatprep.subr.mxu0 0.0
  %202 = vmatpush1.msra.mxu0 0.0
  %203 = vmatprep.subr.mxu0 0.0
  %204 = vmatpush1.msra.mxu0 0.0
  %205 = vmatprep.subr.mxu0 0.0
  %206 = vmatpush1.msra.mxu0 0.0
  %207 = vmatprep.subr.mxu0 0.0
  %208 = vmatpush1.msra.mxu0 0.0
  %209 = vmatprep.subr.mxu0 0.0
  %210 = vmatpush1.msra.mxu0 0.0
  %211 = vmatprep.subr.mxu0 0.0
  %212 = vmatpush1.msra.mxu0 0.0
  %213 = vmatprep.subr.mxu0 0.0
  %214 = vmatpush1.msra.mxu0 0.0
  %215 = vmatprep.subr.mxu0 0.0
  %216 = vmatpush1.msra.mxu0 0.0
  %217 = vmatprep.subr.mxu0 0.0
  %218 = vmatpush1.msra.mxu0 0.0
  %219 = vmatprep.subr.mxu0 0.0
  %220 = vmatpush1.msra.mxu0 0.0
  %221 = vmatprep.subr.mxu0 0.0
  %222 = vmatpush1.msra.mxu0 0.0
  %223 = vmatprep.subr.mxu0 0.0
  %224 = vmatpush1.msra.mxu0 0.0
  %225 = vmatprep.subr.mxu0 0.0
  %226 = vmatpush1.msra.mxu0 %v33
  %227 = vmatprep.subr.mxu0 0.0
  %228 = vmatpush1.msra.mxu0 %v32
  %229 = vmatprep.subr.mxu0 0.0
  %230 = vmatpush1.msra.mxu0 %v31
  %231 = vmatprep.subr.mxu0 0.0
  %232 = vmatpush1.msra.mxu0 %v30
  %233 = vmatprep.subr.mxu0 0.0
  %234 = vmatpush2.msra.mxu0 0.0
  %235 = vmatprep.subr.mxu0 0.0
  %236 = vmatpush2.msra.mxu0 0.0
  %237 = vmatprep.subr.mxu0 0.0
  %238 = vmatpush2.msra.mxu0 0.0
  %239 = vmatprep.subr.mxu0 0.0
  %240 = vmatpush2.msra.mxu0 0.0
  %241 = vmatprep.subr.mxu0 0.0
  %242 = vmatpush2.msra.mxu0 0.0
  %243 = vmatprep.subr.mxu0 0.0
  %244 = vmatpush2.msra.mxu0 0.0
  %245 = vmatprep.subr.mxu0 0.0
  %246 = vmatpush2.msra.mxu0 0.0
  %247 = vmatprep.subr.mxu0 0.0
  %248 = vmatpush2.msra.mxu0 0.0
  %249 = vmatprep.subr.mxu0 0.0
  %250 = vmatpush2.msra.mxu0 0.0
  %251 = vmatprep.subr.mxu0 0.0
  %252 = vmatpush2.msra.mxu0 0.0
  %253 = vmatprep.subr.mxu0 0.0
  %254 = vmatpush2.msra.mxu0 0.0
  %255 = vmatprep.subr.mxu0 0.0
  %256 = vmatpush2.msra.mxu0 0.0
  %257 = vmatprep.subr.mxu0 0.0
  %258 = vmatpush2.msra.mxu0 0.0
  %259 = vmatprep.subr.mxu0 0.0
  %260 = vmatpush2.msra.mxu0 0.0
  %261 = vmatprep.subr.mxu0 0.0
  %262 = vmatpush2.msra.mxu0 0.0
  %263 = vmatprep.subr.mxu0 0.0
  %264 = vmatpush2.msra.mxu0 0.0
  %265 = vmatprep.mubr.f32.mxu0 0.0
  %266 = vmatmul.mubr.f32.gmra.mxu0 %v199
  %v267 = vpop.f32.mrf.mxu0
  %v268 = vadd.f32 0.0, %v267
  %v269 = vpop.f32.mrf.mxu0
  %270 = vdwg.mxu0
  %v271 = vadd.f32 %v195, %v268
  %v272 = vxor.u32 %v271, 2147483648
  %v273 = vmul.f32 %v272, 1.442695
  %v274 = vpow.pop %v273
  %v275 = vadd.f32 %v274, 1.0
  %v276 = vrcp.pop %v275
  %v277 = vmul.f32 1.0, %v276
  %v278 = vtanh.pop %v271
  %v279 = vmul.f32 %v277, %v138
  %281 = vrot.lane.b32.xlu0 %v278, 64
  %v282 = vpop.permute.xlu0 %281
  %v284 = vmul.f32 %v277, %v282
  %286 = vrot.lane.b32.xlu0 %v284, 32
  %v287 = vpop.permute.xlu0 %286
  %v289 = vadd.f32 %v279, %v287
  %v290 = vtanh.pop %v289
  %292 = vrot.lane.b32.xlu0 %v290, 64
  %v293 = vpop.permute.xlu0 %292
  %v295 = vmul.f32 %v277, %v293
  %v296 = vmul.f32 %v295, %v151
  %298 = vrot.lane.b32.xlu0 %v296, 32
  %v299 = vpop.permute.xlu0 %298
  %v301 = vsel %vm42, %v299, 0.0
  %302 = vadd.xlane.f32.xlu0 %v301
  %v303 = vpop.xlane.xlu0 %302
  %v304 = vadd.f32 %v303, %v165
  %v305 = vmax.f32 %v168, %v304
  %v306 = vsub.f32 %v168, %v305
  %v307 = vmul.f32 %v306, 1.442695
  %v308 = vpow.pop %v307
  %v309 = vsub.f32 %v304, %v305
  %v310 = vmul.f32 %v309, 1.442695
  %v311 = vpow.pop %v310
  %v312 = vmul.f32 %v308, %v176
  %v313 = vadd.f32 %v312, %v311
  %315 = vset.pattern.permute.xlu0 0
  %316 = vperm.xlu0 %315, %v308
  %v317 = vpop.permute.xlu0 %316
  %v319 = vmul.f32 %v317, %v193
  %321 = vset.pattern.permute.xlu0 0
  %322 = vperm.xlu0 %321, %v311
  %v323 = vpop.permute.xlu0 %322
  %v325 = vmul.f32 %v323, %v295
  %327 = vrot.lane.b32.xlu0 %v325, 32
  %v328 = vpop.permute.xlu0 %327
  %v330 = vadd.f32 %v319, %v328
  %s331 = scalar_lea.vmem %s0, 16
  %v332 = vld [vmem:[%s331] sm:$0xff]
  %334 = vrot.lane.b32.xlu0 %v295, 32
  %v335 = vpop.permute.xlu0 %334
  %v336 = vsel %vm42, %v335, 0
  %338 = vmatprep.subr.mxu0 0.0
  %339 = vmatpush1.msra.mxu0 0.0
  %340 = vmatprep.subr.mxu0 0.0
  %341 = vmatpush1.msra.mxu0 0.0
  %342 = vmatprep.subr.mxu0 0.0
  %343 = vmatpush1.msra.mxu0 0.0
  %344 = vmatprep.subr.mxu0 0.0
  %345 = vmatpush1.msra.mxu0 0.0
  %346 = vmatprep.subr.mxu0 0.0
  %347 = vmatpush1.msra.mxu0 0.0
  %348 = vmatprep.subr.mxu0 0.0
  %349 = vmatpush1.msra.mxu0 0.0
  %350 = vmatprep.subr.mxu0 0.0
  %351 = vmatpush1.msra.mxu0 0.0
  %352 = vmatprep.subr.mxu0 0.0
  %353 = vmatpush1.msra.mxu0 0.0
  %354 = vmatprep.subr.mxu0 0.0
  %355 = vmatpush1.msra.mxu0 0.0
  %356 = vmatprep.subr.mxu0 0.0
  %357 = vmatpush1.msra.mxu0 0.0
  %358 = vmatprep.subr.mxu0 0.0
  %359 = vmatpush1.msra.mxu0 0.0
  %360 = vmatprep.subr.mxu0 0.0
  %361 = vmatpush1.msra.mxu0 0.0
  %362 = vmatprep.subr.mxu0 0.0
  %363 = vmatpush1.msra.mxu0 %v33
  %364 = vmatprep.subr.mxu0 0.0
  %365 = vmatpush1.msra.mxu0 %v32
  %366 = vmatprep.subr.mxu0 0.0
  %367 = vmatpush1.msra.mxu0 %v31
  %368 = vmatprep.subr.mxu0 0.0
  %369 = vmatpush1.msra.mxu0 %v30
  %370 = vmatprep.subr.mxu0 0.0
  %371 = vmatpush2.msra.mxu0 0.0
  %372 = vmatprep.subr.mxu0 0.0
  %373 = vmatpush2.msra.mxu0 0.0
  %374 = vmatprep.subr.mxu0 0.0
  %375 = vmatpush2.msra.mxu0 0.0
  %376 = vmatprep.subr.mxu0 0.0
  %377 = vmatpush2.msra.mxu0 0.0
  %378 = vmatprep.subr.mxu0 0.0
  %379 = vmatpush2.msra.mxu0 0.0
  %380 = vmatprep.subr.mxu0 0.0
  %381 = vmatpush2.msra.mxu0 0.0
  %382 = vmatprep.subr.mxu0 0.0
  %383 = vmatpush2.msra.mxu0 0.0
  %384 = vmatprep.subr.mxu0 0.0
  %385 = vmatpush2.msra.mxu0 0.0
  %386 = vmatprep.subr.mxu0 0.0
  %387 = vmatpush2.msra.mxu0 0.0
  %388 = vmatprep.subr.mxu0 0.0
  %389 = vmatpush2.msra.mxu0 0.0
  %390 = vmatprep.subr.mxu0 0.0
  %391 = vmatpush2.msra.mxu0 0.0
  %392 = vmatprep.subr.mxu0 0.0
  %393 = vmatpush2.msra.mxu0 0.0
  %394 = vmatprep.subr.mxu0 0.0
  %395 = vmatpush2.msra.mxu0 0.0
  %396 = vmatprep.subr.mxu0 0.0
  %397 = vmatpush2.msra.mxu0 0.0
  %398 = vmatprep.subr.mxu0 0.0
  %399 = vmatpush2.msra.mxu0 0.0
  %400 = vmatprep.subr.mxu0 0.0
  %401 = vmatpush2.msra.mxu0 0.0
  %402 = vmatprep.mubr.f32.mxu0 0.0
  %403 = vmatmul.mubr.f32.gmra.mxu0 %v336
  %v404 = vpop.f32.mrf.mxu0
  %v405 = vadd.f32 0.0, %v404
  %v406 = vpop.f32.mrf.mxu0
  %407 = vdwg.mxu0
  %v408 = vadd.f32 %v332, %v405
  %v409 = vxor.u32 %v408, 2147483648
  %v410 = vmul.f32 %v409, 1.442695
  %v411 = vpow.pop %v410
  %v412 = vadd.f32 %v411, 1.0
  %v413 = vrcp.pop %v412
  %v414 = vmul.f32 1.0, %v413
  %v415 = vtanh.pop %v408
  %v416 = vmul.f32 %v414, %v289
  %418 = vrot.lane.b32.xlu0 %v415, 64
  %v419 = vpop.permute.xlu0 %418
  %v421 = vmul.f32 %v414, %v419
  %423 = vrot.lane.b32.xlu0 %v421, 32
  %v424 = vpop.permute.xlu0 %423
  %v426 = vadd.f32 %v416, %v424
  %v427 = vtanh.pop %v426
  %429 = vrot.lane.b32.xlu0 %v427, 64
  %v430 = vpop.permute.xlu0 %429
  %v432 = vmul.f32 %v414, %v430
  %v433 = vmul.f32 %v432, %v151
  %435 = vrot.lane.b32.xlu0 %v433, 32
  %v436 = vpop.permute.xlu0 %435
  %v438 = vsel %vm42, %v436, 0.0
  %439 = vadd.xlane.f32.xlu0 %v438
  %v440 = vpop.xlane.xlu0 %439
  %v441 = vadd.f32 %v440, %v165
  %v442 = vmax.f32 %v305, %v441
  %v443 = vsub.f32 %v305, %v442
  %v444 = vmul.f32 %v443, 1.442695
  %v445 = vpow.pop %v444
  %v446 = vsub.f32 %v441, %v442
  %v447 = vmul.f32 %v446, 1.442695
  %v448 = vpow.pop %v447
  %v449 = vmul.f32 %v445, %v313
  %v450 = vadd.f32 %v449, %v448
  %452 = vset.pattern.permute.xlu0 0
  %453 = vperm.xlu0 %452, %v445
  %v454 = vpop.permute.xlu0 %453
  %v456 = vmul.f32 %v454, %v330
  %458 = vset.pattern.permute.xlu0 0
  %459 = vperm.xlu0 %458, %v448
  %v460 = vpop.permute.xlu0 %459
  %v462 = vmul.f32 %v460, %v432
  %464 = vrot.lane.b32.xlu0 %v462, 32
  %v465 = vpop.permute.xlu0 %464
  %v467 = vadd.f32 %v456, %v465
  %s468 = scalar_lea.vmem %s0, 24
  %v469 = vld [vmem:[%s468] sm:$0xff]
  %471 = vrot.lane.b32.xlu0 %v432, 32
  %v472 = vpop.permute.xlu0 %471
  %v473 = vsel %vm42, %v472, 0
  %475 = vmatprep.subr.mxu0 0.0
  %476 = vmatpush1.msra.mxu0 0.0
  %477 = vmatprep.subr.mxu0 0.0
  %478 = vmatpush1.msra.mxu0 0.0
  %479 = vmatprep.subr.mxu0 0.0
  %480 = vmatpush1.msra.mxu0 0.0
  %481 = vmatprep.subr.mxu0 0.0
  %482 = vmatpush1.msra.mxu0 0.0
  %483 = vmatprep.subr.mxu0 0.0
  %484 = vmatpush1.msra.mxu0 0.0
  %485 = vmatprep.subr.mxu0 0.0
  %486 = vmatpush1.msra.mxu0 0.0
  %487 = vmatprep.subr.mxu0 0.0
  %488 = vmatpush1.msra.mxu0 0.0
  %489 = vmatprep.subr.mxu0 0.0
  %490 = vmatpush1.msra.mxu0 0.0
  %491 = vmatprep.subr.mxu0 0.0
  %492 = vmatpush1.msra.mxu0 0.0
  %493 = vmatprep.subr.mxu0 0.0
  %494 = vmatpush1.msra.mxu0 0.0
  %495 = vmatprep.subr.mxu0 0.0
  %496 = vmatpush1.msra.mxu0 0.0
  %497 = vmatprep.subr.mxu0 0.0
  %498 = vmatpush1.msra.mxu0 0.0
  %499 = vmatprep.subr.mxu0 0.0
  %500 = vmatpush1.msra.mxu0 %v33
  %501 = vmatprep.subr.mxu0 0.0
  %502 = vmatpush1.msra.mxu0 %v32
  %503 = vmatprep.subr.mxu0 0.0
  %504 = vmatpush1.msra.mxu0 %v31
  %505 = vmatprep.subr.mxu0 0.0
  %506 = vmatpush1.msra.mxu0 %v30
  %507 = vmatprep.subr.mxu0 0.0
  %508 = vmatpush2.msra.mxu0 0.0
  %509 = vmatprep.subr.mxu0 0.0
  %510 = vmatpush2.msra.mxu0 0.0
  %511 = vmatprep.subr.mxu0 0.0
  %512 = vmatpush2.msra.mxu0 0.0
  %513 = vmatprep.subr.mxu0 0.0
  %514 = vmatpush2.msra.mxu0 0.0
  %515 = vmatprep.subr.mxu0 0.0
  %516 = vmatpush2.msra.mxu0 0.0
  %517 = vmatprep.subr.mxu0 0.0
  %518 = vmatpush2.msra.mxu0 0.0
  %519 = vmatprep.subr.mxu0 0.0
  %520 = vmatpush2.msra.mxu0 0.0
  %521 = vmatprep.subr.mxu0 0.0
  %522 = vmatpush2.msra.mxu0 0.0
  %523 = vmatprep.subr.mxu0 0.0
  %524 = vmatpush2.msra.mxu0 0.0
  %525 = vmatprep.subr.mxu0 0.0
  %526 = vmatpush2.msra.mxu0 0.0
  %527 = vmatprep.subr.mxu0 0.0
  %528 = vmatpush2.msra.mxu0 0.0
  %529 = vmatprep.subr.mxu0 0.0
  %530 = vmatpush2.msra.mxu0 0.0
  %531 = vmatprep.subr.mxu0 0.0
  %532 = vmatpush2.msra.mxu0 0.0
  %533 = vmatprep.subr.mxu0 0.0
  %534 = vmatpush2.msra.mxu0 0.0
  %535 = vmatprep.subr.mxu0 0.0
  %536 = vmatpush2.msra.mxu0 0.0
  %537 = vmatprep.subr.mxu0 0.0
  %538 = vmatpush2.msra.mxu0 0.0
  %539 = vmatprep.mubr.f32.mxu0 0.0
  %540 = vmatmul.mubr.f32.gmra.mxu0 %v473
  %v541 = vpop.f32.mrf.mxu0
  %v542 = vadd.f32 0.0, %v541
  %v543 = vpop.f32.mrf.mxu0
  %544 = vdwg.mxu0
  %v545 = vadd.f32 %v469, %v542
  %v546 = vxor.u32 %v545, 2147483648
  %v547 = vmul.f32 %v546, 1.442695
  %v548 = vpow.pop %v547
  %v549 = vadd.f32 %v548, 1.0
  %v550 = vrcp.pop %v549
  %v551 = vmul.f32 1.0, %v550
  %v552 = vtanh.pop %v545
  %v553 = vmul.f32 %v551, %v426
  %555 = vrot.lane.b32.xlu0 %v552, 64
  %v556 = vpop.permute.xlu0 %555
  %v558 = vmul.f32 %v551, %v556
  %560 = vrot.lane.b32.xlu0 %v558, 32
  %v561 = vpop.permute.xlu0 %560
  %v563 = vadd.f32 %v553, %v561
  %v564 = vtanh.pop %v563
  %566 = vrot.lane.b32.xlu0 %v564, 64
  %v567 = vpop.permute.xlu0 %566
  %v569 = vmul.f32 %v551, %v567
  %v570 = vmul.f32 %v569, %v151
  %572 = vrot.lane.b32.xlu0 %v570, 32
  %v573 = vpop.permute.xlu0 %572
  %v575 = vsel %vm42, %v573, 0.0
  %576 = vadd.xlane.f32.xlu0 %v575
  %v577 = vpop.xlane.xlu0 %576
  %v578 = vadd.f32 %v577, %v165
  %v579 = vmax.f32 %v442, %v578
  %v580 = vsub.f32 %v442, %v579
  %v581 = vmul.f32 %v580, 1.442695
  %v582 = vpow.pop %v581
  %v583 = vsub.f32 %v578, %v579
  %v584 = vmul.f32 %v583, 1.442695
  %v585 = vpow.pop %v584
  %v586 = vmul.f32 %v582, %v450
  %v587 = vadd.f32 %v586, %v585
  %589 = vset.pattern.permute.xlu0 0
  %590 = vperm.xlu0 %589, %v582
  %v591 = vpop.permute.xlu0 %590
  %v593 = vmul.f32 %v591, %v467
  %595 = vset.pattern.permute.xlu0 0
  %596 = vperm.xlu0 %595, %v585
  %v597 = vpop.permute.xlu0 %596
  %v599 = vmul.f32 %v597, %v569
  %601 = vrot.lane.b32.xlu0 %v599, 32
  %v602 = vpop.permute.xlu0 %601
  %v604 = vadd.f32 %v593, %v602
  %s605 = scalar_lea.vmem %s0, 32
  %v606 = vld [vmem:[%s605] sm:$0xff]
  %608 = vrot.lane.b32.xlu0 %v569, 32
  %v609 = vpop.permute.xlu0 %608
  %v610 = vsel %vm42, %v609, 0
  %612 = vmatprep.subr.mxu0 0.0
  %613 = vmatpush1.msra.mxu0 0.0
  %614 = vmatprep.subr.mxu0 0.0
  %615 = vmatpush1.msra.mxu0 0.0
  %616 = vmatprep.subr.mxu0 0.0
  %617 = vmatpush1.msra.mxu0 0.0
  %618 = vmatprep.subr.mxu0 0.0
  %619 = vmatpush1.msra.mxu0 0.0
  %620 = vmatprep.subr.mxu0 0.0
  %621 = vmatpush1.msra.mxu0 0.0
  %622 = vmatprep.subr.mxu0 0.0
  %623 = vmatpush1.msra.mxu0 0.0
  %624 = vmatprep.subr.mxu0 0.0
  %625 = vmatpush1.msra.mxu0 0.0
  %626 = vmatprep.subr.mxu0 0.0
  %627 = vmatpush1.msra.mxu0 0.0
  %628 = vmatprep.subr.mxu0 0.0
  %629 = vmatpush1.msra.mxu0 0.0
  %630 = vmatprep.subr.mxu0 0.0
  %631 = vmatpush1.msra.mxu0 0.0
  %632 = vmatprep.subr.mxu0 0.0
  %633 = vmatpush1.msra.mxu0 0.0
  %634 = vmatprep.subr.mxu0 0.0
  %635 = vmatpush1.msra.mxu0 0.0
  %636 = vmatprep.subr.mxu0 0.0
  %637 = vmatpush1.msra.mxu0 %v33
  %638 = vmatprep.subr.mxu0 0.0
  %639 = vmatpush1.msra.mxu0 %v32
  %640 = vmatprep.subr.mxu0 0.0
  %641 = vmatpush1.msra.mxu0 %v31
  %642 = vmatprep.subr.mxu0 0.0
  %643 = vmatpush1.msra.mxu0 %v30
  %644 = vmatprep.subr.mxu0 0.0
  %645 = vmatpush2.msra.mxu0 0.0
  %646 = vmatprep.subr.mxu0 0.0
  %647 = vmatpush2.msra.mxu0 0.0
  %648 = vmatprep.subr.mxu0 0.0
  %649 = vmatpush2.msra.mxu0 0.0
  %650 = vmatprep.subr.mxu0 0.0
  %651 = vmatpush2.msra.mxu0 0.0
  %652 = vmatprep.subr.mxu0 0.0
  %653 = vmatpush2.msra.mxu0 0.0
  %654 = vmatprep.subr.mxu0 0.0
  %655 = vmatpush2.msra.mxu0 0.0
  %656 = vmatprep.subr.mxu0 0.0
  %657 = vmatpush2.msra.mxu0 0.0
  %658 = vmatprep.subr.mxu0 0.0
  %659 = vmatpush2.msra.mxu0 0.0
  %660 = vmatprep.subr.mxu0 0.0
  %661 = vmatpush2.msra.mxu0 0.0
  %662 = vmatprep.subr.mxu0 0.0
  %663 = vmatpush2.msra.mxu0 0.0
  %664 = vmatprep.subr.mxu0 0.0
  %665 = vmatpush2.msra.mxu0 0.0
  %666 = vmatprep.subr.mxu0 0.0
  %667 = vmatpush2.msra.mxu0 0.0
  %668 = vmatprep.subr.mxu0 0.0
  %669 = vmatpush2.msra.mxu0 0.0
  %670 = vmatprep.subr.mxu0 0.0
  %671 = vmatpush2.msra.mxu0 0.0
  %672 = vmatprep.subr.mxu0 0.0
  %673 = vmatpush2.msra.mxu0 0.0
  %674 = vmatprep.subr.mxu0 0.0
  %675 = vmatpush2.msra.mxu0 0.0
  %676 = vmatprep.mubr.f32.mxu0 0.0
  %677 = vmatmul.mubr.f32.gmra.mxu0 %v610
  %v678 = vpop.f32.mrf.mxu0
  %v679 = vadd.f32 0.0, %v678
  %v680 = vpop.f32.mrf.mxu0
  %681 = vdwg.mxu0
  %v682 = vadd.f32 %v606, %v679
  %v683 = vxor.u32 %v682, 2147483648
  %v684 = vmul.f32 %v683, 1.442695
  %v685 = vpow.pop %v684
  %v686 = vadd.f32 %v685, 1.0
  %v687 = vrcp.pop %v686
  %v688 = vmul.f32 1.0, %v687
  %v689 = vtanh.pop %v682
  %v690 = vmul.f32 %v688, %v563
  %692 = vrot.lane.b32.xlu0 %v689, 64
  %v693 = vpop.permute.xlu0 %692
  %v695 = vmul.f32 %v688, %v693
  %697 = vrot.lane.b32.xlu0 %v695, 32
  %v698 = vpop.permute.xlu0 %697
  %v700 = vadd.f32 %v690, %v698
  %v701 = vtanh.pop %v700
  %703 = vrot.lane.b32.xlu0 %v701, 64
  %v704 = vpop.permute.xlu0 %703
  %v706 = vmul.f32 %v688, %v704
  %v707 = vmul.f32 %v706, %v151
  %709 = vrot.lane.b32.xlu0 %v707, 32
  %v710 = vpop.permute.xlu0 %709
  %v712 = vsel %vm42, %v710, 0.0
  %713 = vadd.xlane.f32.xlu0 %v712
  %v714 = vpop.xlane.xlu0 %713
  %v715 = vadd.f32 %v714, %v165
  %v716 = vmax.f32 %v579, %v715
  %v717 = vsub.f32 %v579, %v716
  %v718 = vmul.f32 %v717, 1.442695
  %v719 = vpow.pop %v718
  %v720 = vsub.f32 %v715, %v716
  %v721 = vmul.f32 %v720, 1.442695
  %v722 = vpow.pop %v721
  %v723 = vmul.f32 %v719, %v587
  %v724 = vadd.f32 %v723, %v722
  %726 = vset.pattern.permute.xlu0 0
  %727 = vperm.xlu0 %726, %v719
  %v728 = vpop.permute.xlu0 %727
  %v730 = vmul.f32 %v728, %v604
  %732 = vset.pattern.permute.xlu0 0
  %733 = vperm.xlu0 %732, %v722
  %v734 = vpop.permute.xlu0 %733
  %v736 = vmul.f32 %v734, %v706
  %738 = vrot.lane.b32.xlu0 %v736, 32
  %v739 = vpop.permute.xlu0 %738
  %v741 = vadd.f32 %v730, %v739
  %s742 = scalar_lea.vmem %s0, 40
  %v743 = vld [vmem:[%s742] sm:$0xff]
  %745 = vrot.lane.b32.xlu0 %v706, 32
  %v746 = vpop.permute.xlu0 %745
  %v747 = vsel %vm42, %v746, 0
  %749 = vmatprep.subr.mxu0 0.0
  %750 = vmatpush1.msra.mxu0 0.0
  %751 = vmatprep.subr.mxu0 0.0
  %752 = vmatpush1.msra.mxu0 0.0
  %753 = vmatprep.subr.mxu0 0.0
  %754 = vmatpush1.msra.mxu0 0.0
  %755 = vmatprep.subr.mxu0 0.0
  %756 = vmatpush1.msra.mxu0 0.0
  %757 = vmatprep.subr.mxu0 0.0
  %758 = vmatpush1.msra.mxu0 0.0
  %759 = vmatprep.subr.mxu0 0.0
  %760 = vmatpush1.msra.mxu0 0.0
  %761 = vmatprep.subr.mxu0 0.0
  %762 = vmatpush1.msra.mxu0 0.0
  %763 = vmatprep.subr.mxu0 0.0
  %764 = vmatpush1.msra.mxu0 0.0
  %765 = vmatprep.subr.mxu0 0.0
  %766 = vmatpush1.msra.mxu0 0.0
  %767 = vmatprep.subr.mxu0 0.0
  %768 = vmatpush1.msra.mxu0 0.0
  %769 = vmatprep.subr.mxu0 0.0
  %770 = vmatpush1.msra.mxu0 0.0
  %771 = vmatprep.subr.mxu0 0.0
  %772 = vmatpush1.msra.mxu0 0.0
  %773 = vmatprep.subr.mxu0 0.0
  %774 = vmatpush1.msra.mxu0 %v33
  %775 = vmatprep.subr.mxu0 0.0
  %776 = vmatpush1.msra.mxu0 %v32
  %777 = vmatprep.subr.mxu0 0.0
  %778 = vmatpush1.msra.mxu0 %v31
  %779 = vmatprep.subr.mxu0 0.0
  %780 = vmatpush1.msra.mxu0 %v30
  %781 = vmatprep.subr.mxu0 0.0
  %782 = vmatpush2.msra.mxu0 0.0
  %783 = vmatprep.subr.mxu0 0.0
  %784 = vmatpush2.msra.mxu0 0.0
  %785 = vmatprep.subr.mxu0 0.0
  %786 = vmatpush2.msra.mxu0 0.0
  %787 = vmatprep.subr.mxu0 0.0
  %788 = vmatpush2.msra.mxu0 0.0
  %789 = vmatprep.subr.mxu0 0.0
  %790 = vmatpush2.msra.mxu0 0.0
  %791 = vmatprep.subr.mxu0 0.0
  %792 = vmatpush2.msra.mxu0 0.0
  %793 = vmatprep.subr.mxu0 0.0
  %794 = vmatpush2.msra.mxu0 0.0
  %795 = vmatprep.subr.mxu0 0.0
  %796 = vmatpush2.msra.mxu0 0.0
  %797 = vmatprep.subr.mxu0 0.0
  %798 = vmatpush2.msra.mxu0 0.0
  %799 = vmatprep.subr.mxu0 0.0
  %800 = vmatpush2.msra.mxu0 0.0
  %801 = vmatprep.subr.mxu0 0.0
  %802 = vmatpush2.msra.mxu0 0.0
  %803 = vmatprep.subr.mxu0 0.0
  %804 = vmatpush2.msra.mxu0 0.0
  %805 = vmatprep.subr.mxu0 0.0
  %806 = vmatpush2.msra.mxu0 0.0
  %807 = vmatprep.subr.mxu0 0.0
  %808 = vmatpush2.msra.mxu0 0.0
  %809 = vmatprep.subr.mxu0 0.0
  %810 = vmatpush2.msra.mxu0 0.0
  %811 = vmatprep.subr.mxu0 0.0
  %812 = vmatpush2.msra.mxu0 0.0
  %813 = vmatprep.mubr.f32.mxu0 0.0
  %814 = vmatmul.mubr.f32.gmra.mxu0 %v747
  %v815 = vpop.f32.mrf.mxu0
  %v816 = vadd.f32 0.0, %v815
  %v817 = vpop.f32.mrf.mxu0
  %818 = vdwg.mxu0
  %v819 = vadd.f32 %v743, %v816
  %v820 = vxor.u32 %v819, 2147483648
  %v821 = vmul.f32 %v820, 1.442695
  %v822 = vpow.pop %v821
  %v823 = vadd.f32 %v822, 1.0
  %v824 = vrcp.pop %v823
  %v825 = vmul.f32 1.0, %v824
  %v826 = vtanh.pop %v819
  %v827 = vmul.f32 %v825, %v700
  %829 = vrot.lane.b32.xlu0 %v826, 64
  %v830 = vpop.permute.xlu0 %829
  %v832 = vmul.f32 %v825, %v830
  %834 = vrot.lane.b32.xlu0 %v832, 32
  %v835 = vpop.permute.xlu0 %834
  %v837 = vadd.f32 %v827, %v835
  %v838 = vtanh.pop %v837
  %840 = vrot.lane.b32.xlu0 %v838, 64
  %v841 = vpop.permute.xlu0 %840
  %v843 = vmul.f32 %v825, %v841
  %v844 = vmul.f32 %v843, %v151
  %846 = vrot.lane.b32.xlu0 %v844, 32
  %v847 = vpop.permute.xlu0 %846
  %v849 = vsel %vm42, %v847, 0.0
  %850 = vadd.xlane.f32.xlu0 %v849
  %v851 = vpop.xlane.xlu0 %850
  %v852 = vadd.f32 %v851, %v165
  %v853 = vmax.f32 %v716, %v852
  %v854 = vsub.f32 %v716, %v853
  %v855 = vmul.f32 %v854, 1.442695
  %v856 = vpow.pop %v855
  %v857 = vsub.f32 %v852, %v853
  %v858 = vmul.f32 %v857, 1.442695
  %v859 = vpow.pop %v858
  %v860 = vmul.f32 %v856, %v724
  %v861 = vadd.f32 %v860, %v859
  %863 = vset.pattern.permute.xlu0 0
  %864 = vperm.xlu0 %863, %v856
  %v865 = vpop.permute.xlu0 %864
  %v867 = vmul.f32 %v865, %v741
  %869 = vset.pattern.permute.xlu0 0
  %870 = vperm.xlu0 %869, %v859
  %v871 = vpop.permute.xlu0 %870
  %v873 = vmul.f32 %v871, %v843
  %875 = vrot.lane.b32.xlu0 %v873, 32
  %v876 = vpop.permute.xlu0 %875
  %v878 = vadd.f32 %v867, %v876
  %s879 = scalar_lea.vmem %s0, 48
  %v880 = vld [vmem:[%s879] sm:$0xff]
  %882 = vrot.lane.b32.xlu0 %v843, 32
  %v883 = vpop.permute.xlu0 %882
  %v884 = vsel %vm42, %v883, 0
  %886 = vmatprep.subr.mxu0 0.0
  %887 = vmatpush1.msra.mxu0 0.0
  %888 = vmatprep.subr.mxu0 0.0
  %889 = vmatpush1.msra.mxu0 0.0
  %890 = vmatprep.subr.mxu0 0.0
  %891 = vmatpush1.msra.mxu0 0.0
  %892 = vmatprep.subr.mxu0 0.0
  %893 = vmatpush1.msra.mxu0 0.0
  %894 = vmatprep.subr.mxu0 0.0
  %895 = vmatpush1.msra.mxu0 0.0
  %896 = vmatprep.subr.mxu0 0.0
  %897 = vmatpush1.msra.mxu0 0.0
  %898 = vmatprep.subr.mxu0 0.0
  %899 = vmatpush1.msra.mxu0 0.0
  %900 = vmatprep.subr.mxu0 0.0
  %901 = vmatpush1.msra.mxu0 0.0
  %902 = vmatprep.subr.mxu0 0.0
  %903 = vmatpush1.msra.mxu0 0.0
  %904 = vmatprep.subr.mxu0 0.0
  %905 = vmatpush1.msra.mxu0 0.0
  %906 = vmatprep.subr.mxu0 0.0
  %907 = vmatpush1.msra.mxu0 0.0
  %908 = vmatprep.subr.mxu0 0.0
  %909 = vmatpush1.msra.mxu0 0.0
  %910 = vmatprep.subr.mxu0 0.0
  %911 = vmatpush1.msra.mxu0 %v33
  %912 = vmatprep.subr.mxu0 0.0
  %913 = vmatpush1.msra.mxu0 %v32
  %914 = vmatprep.subr.mxu0 0.0
  %915 = vmatpush1.msra.mxu0 %v31
  %916 = vmatprep.subr.mxu0 0.0
  %917 = vmatpush1.msra.mxu0 %v30
  %918 = vmatprep.subr.mxu0 0.0
  %919 = vmatpush2.msra.mxu0 0.0
  %920 = vmatprep.subr.mxu0 0.0
  %921 = vmatpush2.msra.mxu0 0.0
  %922 = vmatprep.subr.mxu0 0.0
  %923 = vmatpush2.msra.mxu0 0.0
  %924 = vmatprep.subr.mxu0 0.0
  %925 = vmatpush2.msra.mxu0 0.0
  %926 = vmatprep.subr.mxu0 0.0
  %927 = vmatpush2.msra.mxu0 0.0
  %928 = vmatprep.subr.mxu0 0.0
  %929 = vmatpush2.msra.mxu0 0.0
  %930 = vmatprep.subr.mxu0 0.0
  %931 = vmatpush2.msra.mxu0 0.0
  %932 = vmatprep.subr.mxu0 0.0
  %933 = vmatpush2.msra.mxu0 0.0
  %934 = vmatprep.subr.mxu0 0.0
  %935 = vmatpush2.msra.mxu0 0.0
  %936 = vmatprep.subr.mxu0 0.0
  %937 = vmatpush2.msra.mxu0 0.0
  %938 = vmatprep.subr.mxu0 0.0
  %939 = vmatpush2.msra.mxu0 0.0
  %940 = vmatprep.subr.mxu0 0.0
  %941 = vmatpush2.msra.mxu0 0.0
  %942 = vmatprep.subr.mxu0 0.0
  %943 = vmatpush2.msra.mxu0 0.0
  %944 = vmatprep.subr.mxu0 0.0
  %945 = vmatpush2.msra.mxu0 0.0
  %946 = vmatprep.subr.mxu0 0.0
  %947 = vmatpush2.msra.mxu0 0.0
  %948 = vmatprep.subr.mxu0 0.0
  %949 = vmatpush2.msra.mxu0 0.0
  %950 = vmatprep.mubr.f32.mxu0 0.0
  %951 = vmatmul.mubr.f32.gmra.mxu0 %v884
  %v952 = vpop.f32.mrf.mxu0
  %v953 = vadd.f32 0.0, %v952
  %v954 = vpop.f32.mrf.mxu0
  %955 = vdwg.mxu0
  %v956 = vadd.f32 %v880, %v953
  %v957 = vxor.u32 %v956, 2147483648
  %v958 = vmul.f32 %v957, 1.442695
  %v959 = vpow.pop %v958
  %v960 = vadd.f32 %v959, 1.0
  %v961 = vrcp.pop %v960
  %v962 = vmul.f32 1.0, %v961
  %v963 = vtanh.pop %v956
  %v964 = vmul.f32 %v962, %v837
  %966 = vrot.lane.b32.xlu0 %v963, 64
  %v967 = vpop.permute.xlu0 %966
  %v969 = vmul.f32 %v962, %v967
  %971 = vrot.lane.b32.xlu0 %v969, 32
  %v972 = vpop.permute.xlu0 %971
  %v974 = vadd.f32 %v964, %v972
  %v975 = vtanh.pop %v974
  %977 = vrot.lane.b32.xlu0 %v975, 64
  %v978 = vpop.permute.xlu0 %977
  %v980 = vmul.f32 %v962, %v978
  %v981 = vmul.f32 %v980, %v151
  %983 = vrot.lane.b32.xlu0 %v981, 32
  %v984 = vpop.permute.xlu0 %983
  %v986 = vsel %vm42, %v984, 0.0
  %987 = vadd.xlane.f32.xlu0 %v986
  %v988 = vpop.xlane.xlu0 %987
  %v989 = vadd.f32 %v988, %v165
  %v990 = vmax.f32 %v853, %v989
  %v991 = vsub.f32 %v853, %v990
  %v992 = vmul.f32 %v991, 1.442695
  %v993 = vpow.pop %v992
  %v994 = vsub.f32 %v989, %v990
  %v995 = vmul.f32 %v994, 1.442695
  %v996 = vpow.pop %v995
  %v997 = vmul.f32 %v993, %v861
  %v998 = vadd.f32 %v997, %v996
  %1000 = vset.pattern.permute.xlu0 0
  %1001 = vperm.xlu0 %1000, %v993
  %v1002 = vpop.permute.xlu0 %1001
  %v1004 = vmul.f32 %v1002, %v878
  %1006 = vset.pattern.permute.xlu0 0
  %1007 = vperm.xlu0 %1006, %v996
  %v1008 = vpop.permute.xlu0 %1007
  %v1010 = vmul.f32 %v1008, %v980
  %1012 = vrot.lane.b32.xlu0 %v1010, 32
  %v1013 = vpop.permute.xlu0 %1012
  %v1015 = vadd.f32 %v1004, %v1013
  %s1016 = scalar_lea.vmem %s0, 56
  %v1017 = vld [vmem:[%s1016] sm:$0xff]
  %1019 = vrot.lane.b32.xlu0 %v980, 32
  %v1020 = vpop.permute.xlu0 %1019
  %v1021 = vsel %vm42, %v1020, 0
  %1023 = vmatprep.subr.mxu0 0.0
  %1024 = vmatpush1.msra.mxu0 0.0
  %1025 = vmatprep.subr.mxu0 0.0
  %1026 = vmatpush1.msra.mxu0 0.0
  %1027 = vmatprep.subr.mxu0 0.0
  %1028 = vmatpush1.msra.mxu0 0.0
  %1029 = vmatprep.subr.mxu0 0.0
  %1030 = vmatpush1.msra.mxu0 0.0
  %1031 = vmatprep.subr.mxu0 0.0
  %1032 = vmatpush1.msra.mxu0 0.0
  %1033 = vmatprep.subr.mxu0 0.0
  %1034 = vmatpush1.msra.mxu0 0.0
  %1035 = vmatprep.subr.mxu0 0.0
  %1036 = vmatpush1.msra.mxu0 0.0
  %1037 = vmatprep.subr.mxu0 0.0
  %1038 = vmatpush1.msra.mxu0 0.0
  %1039 = vmatprep.subr.mxu0 0.0
  %1040 = vmatpush1.msra.mxu0 0.0
  %1041 = vmatprep.subr.mxu0 0.0
  %1042 = vmatpush1.msra.mxu0 0.0
  %1043 = vmatprep.subr.mxu0 0.0
  %1044 = vmatpush1.msra.mxu0 0.0
  %1045 = vmatprep.subr.mxu0 0.0
  %1046 = vmatpush1.msra.mxu0 0.0
  %1047 = vmatprep.subr.mxu0 0.0
  %1048 = vmatpush1.msra.mxu0 %v33
  %1049 = vmatprep.subr.mxu0 0.0
  %1050 = vmatpush1.msra.mxu0 %v32
  %1051 = vmatprep.subr.mxu0 0.0
  %1052 = vmatpush1.msra.mxu0 %v31
  %1053 = vmatprep.subr.mxu0 0.0
  %1054 = vmatpush1.msra.mxu0 %v30
  %1055 = vmatprep.subr.mxu0 0.0
  %1056 = vmatpush2.msra.mxu0 0.0
  %1057 = vmatprep.subr.mxu0 0.0
  %1058 = vmatpush2.msra.mxu0 0.0
  %1059 = vmatprep.subr.mxu0 0.0
  %1060 = vmatpush2.msra.mxu0 0.0
  %1061 = vmatprep.subr.mxu0 0.0
  %1062 = vmatpush2.msra.mxu0 0.0
  %1063 = vmatprep.subr.mxu0 0.0
  %1064 = vmatpush2.msra.mxu0 0.0
  %1065 = vmatprep.subr.mxu0 0.0
  %1066 = vmatpush2.msra.mxu0 0.0
  %1067 = vmatprep.subr.mxu0 0.0
  %1068 = vmatpush2.msra.mxu0 0.0
  %1069 = vmatprep.subr.mxu0 0.0
  %1070 = vmatpush2.msra.mxu0 0.0
  %1071 = vmatprep.subr.mxu0 0.0
  %1072 = vmatpush2.msra.mxu0 0.0
  %1073 = vmatprep.subr.mxu0 0.0
  %1074 = vmatpush2.msra.mxu0 0.0
  %1075 = vmatprep.subr.mxu0 0.0
  %1076 = vmatpush2.msra.mxu0 0.0
  %1077 = vmatprep.subr.mxu0 0.0
  %1078 = vmatpush2.msra.mxu0 0.0
  %1079 = vmatprep.subr.mxu0 0.0
  %1080 = vmatpush2.msra.mxu0 0.0
  %1081 = vmatprep.subr.mxu0 0.0
  %1082 = vmatpush2.msra.mxu0 0.0
  %1083 = vmatprep.subr.mxu0 0.0
  %1084 = vmatpush2.msra.mxu0 0.0
  %1085 = vmatprep.subr.mxu0 0.0
  %1086 = vmatpush2.msra.mxu0 0.0
  %1087 = vmatprep.mubr.f32.mxu0 0.0
  %1088 = vmatmul.mubr.f32.gmra.mxu0 %v1021
  %v1089 = vpop.f32.mrf.mxu0
  %v1090 = vadd.f32 0.0, %v1089
  %v1091 = vpop.f32.mrf.mxu0
  %1092 = vdwg.mxu0
  %v1093 = vadd.f32 %v1017, %v1090
  %v1094 = vxor.u32 %v1093, 2147483648
  %v1095 = vmul.f32 %v1094, 1.442695
  %v1096 = vpow.pop %v1095
  %v1097 = vadd.f32 %v1096, 1.0
  %v1098 = vrcp.pop %v1097
  %v1099 = vmul.f32 1.0, %v1098
  %v1100 = vtanh.pop %v1093
  %v1101 = vmul.f32 %v1099, %v974
  %1103 = vrot.lane.b32.xlu0 %v1100, 64
  %v1104 = vpop.permute.xlu0 %1103
  %v1106 = vmul.f32 %v1099, %v1104
  %1108 = vrot.lane.b32.xlu0 %v1106, 32
  %v1109 = vpop.permute.xlu0 %1108
  %v1111 = vadd.f32 %v1101, %v1109
  %v1112 = vtanh.pop %v1111
  %1114 = vrot.lane.b32.xlu0 %v1112, 64
  %v1115 = vpop.permute.xlu0 %1114
  %v1117 = vmul.f32 %v1099, %v1115
  %v1118 = vmul.f32 %v1117, %v151
  %1120 = vrot.lane.b32.xlu0 %v1118, 32
  %v1121 = vpop.permute.xlu0 %1120
  %v1123 = vsel %vm42, %v1121, 0.0
  %1124 = vadd.xlane.f32.xlu0 %v1123
  %v1125 = vpop.xlane.xlu0 %1124
  %v1126 = vadd.f32 %v1125, %v165
  %v1127 = vmax.f32 %v990, %v1126
  %v1128 = vsub.f32 %v990, %v1127
  %v1129 = vmul.f32 %v1128, 1.442695
  %v1130 = vpow.pop %v1129
  %v1131 = vsub.f32 %v1126, %v1127
  %v1132 = vmul.f32 %v1131, 1.442695
  %v1133 = vpow.pop %v1132
  %v1134 = vmul.f32 %v1130, %v998
  %v1135 = vadd.f32 %v1134, %v1133
  %1137 = vset.pattern.permute.xlu0 0
  %1138 = vperm.xlu0 %1137, %v1130
  %v1139 = vpop.permute.xlu0 %1138
  %v1141 = vmul.f32 %v1139, %v1015
  %1143 = vset.pattern.permute.xlu0 0
  %1144 = vperm.xlu0 %1143, %v1133
  %v1145 = vpop.permute.xlu0 %1144
  %v1147 = vmul.f32 %v1145, %v1117
  %1149 = vrot.lane.b32.xlu0 %v1147, 32
  %v1150 = vpop.permute.xlu0 %1149
  %v1152 = vadd.f32 %v1141, %v1150
  %1154 = vrot.lane.b32.xlu0 %v1117, 32
  %v1155 = vpop.permute.xlu0 %1154
  %1157 = vst.msk [vmem:[#allocation2] sm:$0xff] %vm42, %v1155
  %1159 = vrot.lane.b32.xlu0 %v1111, 96
  %v1160 = vpop.permute.xlu0 %1159
  %1162 = vst.msk [vmem:[#allocation3] sm:$0xff] %vm42, %v1160
  %vm1163 = vcmask 7168
  %1164 = vst.msk [vmem:[#allocation4] sm:$0xff] %vm1163, %v1127
  %1165 = vst.msk [vmem:[#allocation5] sm:$0xff] %vm1163, %v1135
  %1166 = vst.msk [vmem:[#allocation6] sm:$0xff] %vm42, %v1152
  // Predicated region
  $region22: #{lstm_with_attention.1} parent=0 // pred_check
    %p1167 = pneg %p19
  $region23: #{lstm_with_attention.1} parent=0 // pred_check_branch
    %1169 = sbr.rel (%p1167) target = $region25
  $region24: #{lstm_with_attention.1} parent=0 // pred_region
    %v1170 = vrcp.pop %v1135
    %1172 = vset.pattern.permute.xlu0 0
    %1173 = vperm.xlu0 %1172, %v1170
    %v1174 = vpop.permute.xlu0 %1173
    %v1176 = vmul.f32 %v1152, %v1174
    %1177 = vst.msk [vmem:[%s4] sm:$0xff] %vm42, %v1176
  $region25: #{lstm_with_attention.1} parent=0 // pred_fallthru
    _
  // Predicated region
  $region26: #{lstm_with_attention.1} parent=0 // pred_check
    _
  $region27: #{lstm_with_attention.1} parent=0 // pred_check_branch
    %1179 = sbr.rel (0) target = $region29
  $region28: #{lstm_with_attention.1} parent=0 // pred_region
    _
  $region29: #{lstm_with_attention.1} parent=0 // pred_fallthru
    _
  // Predicated region
  $region30: #{lstm_with_attention.1} parent=0 // pred_check
    _
  $region31: #{lstm_with_attention.1} parent=0 // pred_check_branch
    %1181 = sbr.rel (0) target = $region33
  $region32: #{lstm_with_attention.1} parent=0 // pred_region
    _
  $region33: #{lstm_with_attention.1} parent=0 // pred_fallthru
    _

</llo_original>
